<compile_context>
chip_gen: v7x
topology: tpu7x:2x2x1
jax: 0.10.0
libtpu: 0.0.40
codegen_flags: <defaults>
</compile_context>

<pallas_src>
import numpy as np
import jax
import jax.numpy as jnp
from jax.experimental import pallas as pl
from jax.experimental.pallas import tpu as pltpu

# ---- model hyper-parameters (consistent with the PyTorch module) ------------
C, H, W = 4, 16, 16                       # input_shape = (4, 16, 16)
N_PATCHES = 4
PATCH = (H // N_PATCHES, W // N_PATCHES)  # (4, 4)
INPUT_D = C * PATCH[0] * PATCH[1]         # 64
HIDDEN_D = 32
N_HEADS = 2
D_HEAD = HIDDEN_D // N_HEADS              # 16
SEQ = N_PATCHES ** 2 + 1                  # 17 tokens (class token + patches)
LN_EPS = 1e-5
BATCH_BLOCK = 8                           # images per grid step; 8*17=136 rows (mult of 8)
NEG_INF = -1e30


def get_positional_embeddings(sequence_length, d):
    """Same formula as the PyTorch helper (sin on even j, cos on odd j)."""
    i = np.arange(sequence_length, dtype=np.float32)[:, None]
    j = np.arange(d, dtype=np.float32)[None, :]
    even = np.sin(i / 10000.0 ** (j / d))
    odd = np.cos(i / 10000.0 ** ((j - 1.0) / d))
    pe = np.where((np.arange(d)[None, :] % 2) == 0, even, odd)
    return jnp.asarray(pe, dtype=jnp.float32)


# ---- Pallas kernel -----------------------------------------------------------
def vit_kernel(patches_ref, wm_ref, aux_ref, wqkv_ref, bqkv_ref,
               seg_ref, segt_ref, bias_ref, out_ref):
    f32 = jnp.float32
    add2d = aux_ref[0]     # (Bn*SEQ, 32): row0/image = cls + pos[0], rest = bm + pos[1:]
    gamma2d = aux_ref[1]   # LayerNorm weight, tiled per image
    beta2d = aux_ref[2]    # LayerNorm bias,  tiled per image

    # --- patch embedding: one flat (Bn*SEQ, 64) x (64, 32) matmul -------------
    # The class-token row of every image is a zero patch row, so its embedding
    # is zero and the token value arrives purely via add2d (no in-kernel concat).
    emb = jnp.dot(patches_ref[...], wm_ref[...], preferred_element_type=f32)
    tokens = emb + add2d                                    # (Bn*SEQ, HIDDEN_D)

    # --- LayerNorm over each image's (SEQ, HIDDEN_D) slab ---------------------
    # Per-image statistics on the flat layout via segment-selector matmuls.
    seg = seg_ref[...]                                      # (Bn, Bn*SEQ), 0/1
    segt = segt_ref[...]                                    # (Bn*SEQ, Bn)
    inv_seq = 1.0 / float(SEQ)
    col_mean = jnp.dot(segt, jnp.dot(seg, tokens, preferred_element_type=f32),
                       preferred_element_type=f32) * inv_seq        # per-image col means
    mu = jnp.mean(col_mean, axis=-1, keepdims=True)                  # (Bn*SEQ, 1)
    xc = tokens - mu
    col_msq = jnp.dot(segt, jnp.dot(seg, xc * xc, preferred_element_type=f32),
                      preferred_element_type=f32) * inv_seq
    var = jnp.mean(col_msq, axis=-1, keepdims=True)                  # (Bn*SEQ, 1)
    xn = xc * jax.lax.rsqrt(var + LN_EPS) * gamma2d + beta2d

    # --- fused Q|K|V: one flat (Bn*SEQ, 32) x (32, 96) matmul -----------------
    qkv = jnp.dot(xn, wqkv_ref[...], preferred_element_type=f32) + bqkv_ref[...]
    v_full = qkv[:, 2 * HIDDEN_D:3 * HIDDEN_D]              # (Bn*SEQ, HIDDEN_D)

    # --- attention: block-diagonal over images on the flat rows ---------------
    bias = bias_ref[...]                                    # 0 in-image, -1e30 cross-image
    col = jax.lax.broadcasted_iota(jnp.int32, (1, HIDDEN_D), 1)
    scale = 1.0 / float(D_HEAD) ** 0.5

    o_all = jnp.zeros_like(v_full)
    for h in range(N_HEADS):
        lo, hi = h * D_HEAD, (h + 1) * D_HEAD
        qh = qkv[:, lo:hi]                                  # (Bn*SEQ, D_HEAD)
        kh = qkv[:, HIDDEN_D + lo:HIDDEN_D + hi]
        s = jax.lax.dot_general(qh, kh, (((1,), (1,)), ((), ())),
                                preferred_element_type=f32) * scale + bias
        s = s - jnp.max(s, axis=-1, keepdims=True)
        e = jnp.exp(s)                                      # cross-image entries underflow to 0
        attn = e / jnp.sum(e, axis=-1, keepdims=True)       # exact division (correctness fix)
        # Masked-V places this head's output in its own 16 columns without any
        # lane-axis concat or masked partial store.
        vh = jnp.where((col >= lo) & (col < hi), v_full, 0.0)
        o_all = o_all + jnp.dot(attn, vh, preferred_element_type=f32)

    # Residual + single full-width lane-dense store for the whole block.
    out_ref[...] = tokens + o_all


# ---- host-side packing & wrapper ---------------------------------------------
def _block_diag(w):
    """(N_HEADS, D_HEAD, D_HEAD) -> block-diagonal (HIDDEN_D, HIDDEN_D)."""
    out = jnp.zeros((HIDDEN_D, HIDDEN_D), jnp.float32)
    for h in range(N_HEADS):
        out = out.at[h * D_HEAD:(h + 1) * D_HEAD,
                     h * D_HEAD:(h + 1) * D_HEAD].set(w[h])
    return out


def my_vit_forward(images, params, batch_block=BATCH_BLOCK):
    n = images.shape[0]
    bn = min(batch_block, n)                      # images per grid step
    n_pad = ((n + bn - 1) // bn) * bn             # pad batch to a multiple of bn
    bns = bn * SEQ                                # rows per block (136 when bn=8)

    # Exact PyTorch semantics: raw reshape of the NCHW tensor, then a zero row
    # per image for the class token (its value is injected via the additive term).
    patches = images.reshape(n, N_PATCHES ** 2, INPUT_D).astype(jnp.float32)
    patches = jnp.concatenate(
        [jnp.zeros((n, 1, INPUT_D), jnp.float32), patches], axis=1)   # (n, SEQ, 64)
    if n_pad != n:
        patches = jnp.concatenate(
            [patches, jnp.zeros((n_pad - n, SEQ, INPUT_D), jnp.float32)], axis=0)
    patches2d = patches.reshape(n_pad * SEQ, INPUT_D)                 # flat rows

    pos = params["pos"]
    add = jnp.concatenate([params["cls"] + pos[0:1],
                           params["bm"] + pos[1:]], axis=0)           # (SEQ, 32)
    aux = jnp.stack([jnp.tile(add, (bn, 1)),
                     jnp.tile(params["gamma"], (bn, 1)),
                     jnp.tile(params["beta"], (bn, 1))], axis=0)      # (3, bns, 32)

    wqkv = jnp.concatenate([_block_diag(params["wq"]),
                            _block_diag(params["wk"]),
                            _block_diag(params["wv"])], axis=1)       # (32, 96)
    bqkv = jnp.concatenate([params["bq"].reshape(1, HIDDEN_D),
                            params["bk"].reshape(1, HIDDEN_D),
                            params["bv"].reshape(1, HIDDEN_D)], axis=1)  # (1, 96)

    eye = jnp.eye(bn, dtype=jnp.float32)
    seg = jnp.kron(eye, jnp.ones((1, SEQ), jnp.float32))              # (bn, bns)
    segt = seg.T                                                      # (bns, bn)
    block_mask = jnp.kron(eye, jnp.ones((SEQ, SEQ), jnp.float32))     # (bns, bns)
    attn_bias = (1.0 - block_mask) * NEG_INF                          # 0 / -1e30

    in_specs = [
        pl.BlockSpec((bns, INPUT_D), lambda i: (i, 0)),               # patches block
        pl.BlockSpec((INPUT_D, HIDDEN_D), lambda i: (0, 0)),          # patch-embed weight
        pl.BlockSpec((3, bns, HIDDEN_D), lambda i: (0, 0, 0)),        # [add, gamma, beta]
        pl.BlockSpec((HIDDEN_D, 3 * HIDDEN_D), lambda i: (0, 0)),     # block-diag Wq|Wk|Wv
        pl.BlockSpec((1, 3 * HIDDEN_D), lambda i: (0, 0)),            # bq|bk|bv
        pl.BlockSpec((bn, bns), lambda i: (0, 0)),                    # segment selector
        pl.BlockSpec((bns, bn), lambda i: (0, 0)),                    # its transpose
        pl.BlockSpec((bns, bns), lambda i: (0, 0)),                   # attention bias mask
    ]
    out_specs = pl.BlockSpec((bns, HIDDEN_D), lambda i: (i, 0))

    out2d = pl.pallas_call(
        vit_kernel,
        out_shape=jax.ShapeDtypeStruct((n_pad * SEQ, HIDDEN_D), jnp.float32),
        grid=(n_pad // bn,),
        in_specs=in_specs,
        out_specs=out_specs,
        compiler_params=pltpu.CompilerParams(dimension_semantics=("parallel",)),
    )(patches2d, params["wm"], aux, wqkv, bqkv, seg, segt, attn_bias)

    return out2d.reshape(n_pad, SEQ, HIDDEN_D)[:n]


# ---- pure-JAX reference for correctness check --------------------------------
def reference_forward(images, params):
    n = images.shape[0]
    patches = images.reshape(n, N_PATCHES ** 2, INPUT_D)
    tokens = patches @ params["wm"] + params["bm"]
    cls = jnp.broadcast_to(params["cls"], (n, 1, HIDDEN_D))
    tokens = jnp.concatenate([cls, tokens], axis=1) + params["pos"][None]
    mu = jnp.mean(tokens, axis=(1, 2), keepdims=True)
    var = jnp.mean((tokens - mu) ** 2, axis=(1, 2), keepdims=True)
    xn = (tokens - mu) / jnp.sqrt(var + LN_EPS) * params["gamma"] + params["beta"]
    heads = []
    for h in range(N_HEADS):
        seq = xn[:, :, h * D_HEAD:(h + 1) * D_HEAD]
        q = seq @ params["wq"][h] + params["bq"][h]
        k = seq @ params["wk"][h] + params["bk"][h]
        v = seq @ params["wv"][h] + params["bv"][h]
        s = jnp.einsum("nqd,nkd->nqk", q, k) / float(D_HEAD) ** 0.5
        attn = jax.nn.softmax(s, axis=-1)
        heads.append(jnp.einsum("nqk,nkd->nqd", attn, v))
    return tokens + jnp.concatenate(heads, axis=-1)


def make_params(key):
    ks = jax.random.split(key, 9)
    f32 = jnp.float32
    return {
        # linear_mapper: stored as (in, out) so the kernel computes x @ W + b
        "wm": (jax.random.normal(ks[0], (INPUT_D, HIDDEN_D), f32) / np.sqrt(INPUT_D)),
        "bm": jax.random.normal(ks[1], (1, HIDDEN_D), f32) * 0.02,
        "cls": jax.random.uniform(ks[2], (1, HIDDEN_D), f32),
        "pos": get_positional_embeddings(SEQ, HIDDEN_D),
        "gamma": jnp.ones((SEQ, HIDDEN_D), f32),   # nn.LayerNorm((17,32)) default weight
        "beta": jnp.zeros((SEQ, HIDDEN_D), f32),   # nn.LayerNorm((17,32)) default bias
        "wq": jax.random.normal(ks[3], (N_HEADS, D_HEAD, D_HEAD), f32) / np.sqrt(D_HEAD),
        "bq": jax.random.normal(ks[4], (N_HEADS, 1, D_HEAD), f32) * 0.02,
        "wk": jax.random.normal(ks[5], (N_HEADS, D_HEAD, D_HEAD), f32) / np.sqrt(D_HEAD),
        "bk": jax.random.normal(ks[6], (N_HEADS, 1, D_HEAD), f32) * 0.02,
        "wv": jax.random.normal(ks[7], (N_HEADS, D_HEAD, D_HEAD), f32) / np.sqrt(D_HEAD),
        "bv": jax.random.normal(ks[8], (N_HEADS, 1, D_HEAD), f32) * 0.02,
    }


if __name__ == "__main__":
    key = jax.random.PRNGKey(0)
    k_img, k_par = jax.random.split(key)
    images = jax.random.normal(k_img, (2, C, H, W), jnp.float32)   # NCHW
    params = make_params(k_par)

    out = my_vit_forward(images, params)
    out = jax.block_until_ready(out)

    ref = jax.block_until_ready(reference_forward(images, params))
    assert out.shape == (2, SEQ, HIDDEN_D), out.shape
    np.testing.assert_allclose(np.asarray(out), np.asarray(ref), rtol=2e-3, atol=2e-3)

    print("KERNEL_OK")
</pallas_src>

<mosaic_0001>
module attributes {stable_mosaic.version = 11 : i64} {
  func.func @vit_kernel(%arg0: i32, %arg1: memref<34x64xf32, #tpu.memory_space<vmem>>, %arg2: memref<64x32xf32, #tpu.memory_space<vmem>>, %arg3: memref<3x34x32xf32, #tpu.memory_space<vmem>>, %arg4: memref<32x96xf32, #tpu.memory_space<vmem>>, %arg5: memref<1x96xf32, #tpu.memory_space<vmem>>, %arg6: memref<2x34xf32, #tpu.memory_space<vmem>>, %arg7: memref<34x2xf32, #tpu.memory_space<vmem>>, %arg8: memref<34x34xf32, #tpu.memory_space<vmem>>, %arg9: memref<34x32xf32, #tpu.memory_space<vmem>>) attributes {dimension_semantics = [#tpu.dimension_semantics<parallel>], iteration_bounds = array<i64: 1>, scalar_prefetch = 0 : i64, scratch_operands = 0 : i64, tpu.core_type = #tpu.core_type<tc>, window_params = [{transform_indices = @transform_0, window_bounds = array<i64: 34, 64>}, {pipeline_mode = #tpu.pipeline_mode<synchronous>, transform_indices = @transform_1, window_bounds = array<i64: 64, 32>}, {pipeline_mode = #tpu.pipeline_mode<synchronous>, transform_indices = @transform_2, window_bounds = array<i64: 3, 34, 32>}, {pipeline_mode = #tpu.pipeline_mode<synchronous>, transform_indices = @transform_3, window_bounds = array<i64: 32, 96>}, {pipeline_mode = #tpu.pipeline_mode<synchronous>, transform_indices = @transform_4, window_bounds = array<i64: 1, 96>}, {pipeline_mode = #tpu.pipeline_mode<synchronous>, transform_indices = @transform_5, window_bounds = array<i64: 2, 34>}, {pipeline_mode = #tpu.pipeline_mode<synchronous>, transform_indices = @transform_6, window_bounds = array<i64: 34, 2>}, {pipeline_mode = #tpu.pipeline_mode<synchronous>, transform_indices = @transform_7, window_bounds = array<i64: 34, 34>}, {transform_indices = @transform_8, window_bounds = array<i64: 34, 32>}]} {
    %c0 = arith.constant 0 : index
    %c0_0 = arith.constant 0 : index
    %c0_1 = arith.constant 0 : index
    %0 = vector.load %arg3[%c0, %c0_0, %c0_1] : memref<3x34x32xf32, #tpu.memory_space<vmem>>, vector<1x34x32xf32>
    %1 = vector.shape_cast %0 : vector<1x34x32xf32> to vector<34x32xf32>
    %c1 = arith.constant 1 : index
    %c0_2 = arith.constant 0 : index
    %c0_3 = arith.constant 0 : index
    %2 = vector.load %arg3[%c1, %c0_2, %c0_3] : memref<3x34x32xf32, #tpu.memory_space<vmem>>, vector<1x34x32xf32>
    %3 = vector.shape_cast %2 : vector<1x34x32xf32> to vector<34x32xf32>
    %c2 = arith.constant 2 : index
    %c0_4 = arith.constant 0 : index
    %c0_5 = arith.constant 0 : index
    %4 = vector.load %arg3[%c2, %c0_4, %c0_5] : memref<3x34x32xf32, #tpu.memory_space<vmem>>, vector<1x34x32xf32>
    %5 = vector.shape_cast %4 : vector<1x34x32xf32> to vector<34x32xf32>
    %c0_6 = arith.constant 0 : index
    %c0_7 = arith.constant 0 : index
    %6 = vector.load %arg1[%c0_6, %c0_7] : memref<34x64xf32, #tpu.memory_space<vmem>>, vector<34x64xf32>
    %c0_8 = arith.constant 0 : index
    %c0_9 = arith.constant 0 : index
    %7 = vector.load %arg2[%c0_8, %c0_9] : memref<64x32xf32, #tpu.memory_space<vmem>>, vector<64x32xf32>
    %cst = arith.constant dense<0.000000e+00> : vector<34x32xf32>
    %8 = tpu.matmul %6, %7, %cst {dimension_numbers = #tpu.dot_dimension_numbers<[1], [0], [0], [1], [0, 0, 1, 1], [], []>} : vector<34x64xf32>, vector<64x32xf32>, vector<34x32xf32> -> vector<34x32xf32>
    %9 = arith.addf %8, %1 : vector<34x32xf32>
    %c0_10 = arith.constant 0 : index
    %c0_11 = arith.constant 0 : index
    %10 = vector.load %arg6[%c0_10, %c0_11] : memref<2x34xf32, #tpu.memory_space<vmem>>, vector<2x34xf32>
    %c0_12 = arith.constant 0 : index
    %c0_13 = arith.constant 0 : index
    %11 = vector.load %arg7[%c0_12, %c0_13] : memref<34x2xf32, #tpu.memory_space<vmem>>, vector<34x2xf32>
    %cst_14 = arith.constant dense<0.000000e+00> : vector<2x32xf32>
    %12 = tpu.matmul %10, %9, %cst_14 {dimension_numbers = #tpu.dot_dimension_numbers<[1], [0], [0], [1], [0, 0, 1, 1], [], []>} : vector<2x34xf32>, vector<34x32xf32>, vector<2x32xf32> -> vector<2x32xf32>
    %cst_15 = arith.constant dense<0.000000e+00> : vector<34x32xf32>
    %13 = tpu.matmul %11, %12, %cst_15 {dimension_numbers = #tpu.dot_dimension_numbers<[1], [0], [0], [1], [0, 0, 1, 1], [], []>} : vector<34x2xf32>, vector<2x32xf32>, vector<34x32xf32> -> vector<34x32xf32>
    %cst_16 = arith.constant 0.0588235296 : f32
    %14 = vector.broadcast %cst_16 : f32 to vector<34x32xf32>
    %15 = arith.mulf %13, %14 : vector<34x32xf32>
    %cst_17 = arith.constant dense<0.000000e+00> : vector<34xf32>
    %16 = vector.multi_reduction <add>, %15, %cst_17 [1] : vector<34x32xf32> to vector<34xf32>
    %17 = vector.shape_cast %16 : vector<34xf32> to vector<34x1xf32>
    %cst_18 = arith.constant 3.200000e+01 : f32
    %18 = vector.broadcast %cst_18 : f32 to vector<34x1xf32>
    %19 = arith.divf %17, %18 : vector<34x1xf32>
    %20 = vector.broadcast %19 : vector<34x1xf32> to vector<34x32xf32>
    %21 = arith.subf %9, %20 : vector<34x32xf32>
    %22 = arith.mulf %21, %21 : vector<34x32xf32>
    %cst_19 = arith.constant dense<0.000000e+00> : vector<2x32xf32>
    %23 = tpu.matmul %10, %22, %cst_19 {dimension_numbers = #tpu.dot_dimension_numbers<[1], [0], [0], [1], [0, 0, 1, 1], [], []>} : vector<2x34xf32>, vector<34x32xf32>, vector<2x32xf32> -> vector<2x32xf32>
    %cst_20 = arith.constant dense<0.000000e+00> : vector<34x32xf32>
    %24 = tpu.matmul %11, %23, %cst_20 {dimension_numbers = #tpu.dot_dimension_numbers<[1], [0], [0], [1], [0, 0, 1, 1], [], []>} : vector<34x2xf32>, vector<2x32xf32>, vector<34x32xf32> -> vector<34x32xf32>
    %cst_21 = arith.constant 0.0588235296 : f32
    %25 = vector.broadcast %cst_21 : f32 to vector<34x32xf32>
    %26 = arith.mulf %24, %25 : vector<34x32xf32>
    %cst_22 = arith.constant dense<0.000000e+00> : vector<34xf32>
    %27 = vector.multi_reduction <add>, %26, %cst_22 [1] : vector<34x32xf32> to vector<34xf32>
    %28 = vector.shape_cast %27 : vector<34xf32> to vector<34x1xf32>
    %cst_23 = arith.constant 3.200000e+01 : f32
    %29 = vector.broadcast %cst_23 : f32 to vector<34x1xf32>
    %30 = arith.divf %28, %29 : vector<34x1xf32>
    %cst_24 = arith.constant 9.99999974E-6 : f32
    %31 = vector.broadcast %cst_24 : f32 to vector<34x1xf32>
    %32 = arith.addf %30, %31 : vector<34x1xf32>
    %33 = math.rsqrt %32 : vector<34x1xf32>
    %34 = vector.broadcast %33 : vector<34x1xf32> to vector<34x32xf32>
    %35 = arith.mulf %21, %34 : vector<34x32xf32>
    %36 = arith.mulf %35, %3 : vector<34x32xf32>
    %37 = arith.addf %36, %5 : vector<34x32xf32>
    %c0_25 = arith.constant 0 : index
    %c0_26 = arith.constant 0 : index
    %38 = vector.load %arg4[%c0_25, %c0_26] : memref<32x96xf32, #tpu.memory_space<vmem>>, vector<32x96xf32>
    %cst_27 = arith.constant dense<0.000000e+00> : vector<34x96xf32>
    %39 = tpu.matmul %37, %38, %cst_27 {dimension_numbers = #tpu.dot_dimension_numbers<[1], [0], [0], [1], [0, 0, 1, 1], [], []>} : vector<34x32xf32>, vector<32x96xf32>, vector<34x96xf32> -> vector<34x96xf32>
    %c0_28 = arith.constant 0 : index
    %c0_29 = arith.constant 0 : index
    %40 = vector.load %arg5[%c0_28, %c0_29] : memref<1x96xf32, #tpu.memory_space<vmem>>, vector<1x96xf32>
    %41 = vector.broadcast %40 : vector<1x96xf32> to vector<34x96xf32>
    %42 = arith.addf %39, %41 : vector<34x96xf32>
    %43 = vector.extract_strided_slice %42 {offsets = [0, 64], sizes = [34, 32], strides = [1, 1]} : vector<34x96xf32> to vector<34x32xf32>
    %c0_30 = arith.constant 0 : index
    %c0_31 = arith.constant 0 : index
    %44 = vector.load %arg8[%c0_30, %c0_31] : memref<34x34xf32, #tpu.memory_space<vmem>>, vector<34x34xf32>
    %45 = tpu.iota {dimensions = array<i32: 1>} : vector<1x32xi32>
    %cst_32 = arith.constant 0.000000e+00 : f32
    %46 = vector.broadcast %cst_32 : f32 to vector<34x32xf32>
    %47 = vector.extract_strided_slice %42 {offsets = [0, 0], sizes = [34, 16], strides = [1, 1]} : vector<34x96xf32> to vector<34x16xf32>
    %48 = vector.extract_strided_slice %42 {offsets = [0, 32], sizes = [34, 16], strides = [1, 1]} : vector<34x96xf32> to vector<34x16xf32>
    %cst_33 = arith.constant dense<0.000000e+00> : vector<34x34xf32>
    %49 = tpu.matmul %47, %48, %cst_33 {dimension_numbers = #tpu.dot_dimension_numbers<[1], [1], [0], [0], [0, 0, 1, 0], [], []>} : vector<34x16xf32>, vector<34x16xf32>, vector<34x34xf32> -> vector<34x34xf32>
    %cst_34 = arith.constant 2.500000e-01 : f32
    %50 = vector.broadcast %cst_34 : f32 to vector<34x34xf32>
    %51 = arith.mulf %49, %50 : vector<34x34xf32>
    %52 = arith.addf %51, %44 : vector<34x34xf32>
    %cst_35 = arith.constant dense<0xFF800000> : vector<34xf32>
    %53 = vector.multi_reduction <maximumf>, %52, %cst_35 [1] : vector<34x34xf32> to vector<34xf32>
    %54 = vector.shape_cast %53 : vector<34xf32> to vector<34x1xf32>
    %55 = vector.broadcast %54 : vector<34x1xf32> to vector<34x34xf32>
    %56 = arith.subf %52, %55 : vector<34x34xf32>
    %57 = math.exp %56 : vector<34x34xf32>
    %cst_36 = arith.constant dense<0.000000e+00> : vector<34xf32>
    %58 = vector.multi_reduction <add>, %57, %cst_36 [1] : vector<34x34xf32> to vector<34xf32>
    %59 = vector.shape_cast %58 : vector<34xf32> to vector<34x1xf32>
    %60 = vector.broadcast %59 : vector<34x1xf32> to vector<34x34xf32>
    %61 = arith.divf %57, %60 : vector<34x34xf32>
    %c0_i32 = arith.constant 0 : i32
    %62 = vector.broadcast %c0_i32 : i32 to vector<1x32xi32>
    %63 = arith.cmpi sge, %45, %62 : vector<1x32xi32>
    %c16_i32 = arith.constant 16 : i32
    %64 = vector.broadcast %c16_i32 : i32 to vector<1x32xi32>
    %65 = arith.cmpi slt, %45, %64 : vector<1x32xi32>
    %66 = arith.andi %63, %65 : vector<1x32xi1>
    %cst_37 = arith.constant 0.000000e+00 : f32
    %67 = vector.shape_cast %66 : vector<1x32xi1> to vector<1x32xi1>
    %68 = vector.broadcast %67 : vector<1x32xi1> to vector<34x32xi1>
    %69 = vector.broadcast %cst_37 : f32 to vector<34x32xf32>
    %70 = arith.select %68, %43, %69 : vector<34x32xi1>, vector<34x32xf32>
    %cst_38 = arith.constant dense<0.000000e+00> : vector<34x32xf32>
    %71 = tpu.matmul %61, %70, %cst_38 {dimension_numbers = #tpu.dot_dimension_numbers<[1], [0], [0], [1], [0, 0, 1, 1], [], []>} : vector<34x34xf32>, vector<34x32xf32>, vector<34x32xf32> -> vector<34x32xf32>
    %72 = arith.addf %46, %71 : vector<34x32xf32>
    %73 = vector.extract_strided_slice %42 {offsets = [0, 16], sizes = [34, 16], strides = [1, 1]} : vector<34x96xf32> to vector<34x16xf32>
    %74 = vector.extract_strided_slice %42 {offsets = [0, 48], sizes = [34, 16], strides = [1, 1]} : vector<34x96xf32> to vector<34x16xf32>
    %cst_39 = arith.constant dense<0.000000e+00> : vector<34x34xf32>
    %75 = tpu.matmul %73, %74, %cst_39 {dimension_numbers = #tpu.dot_dimension_numbers<[1], [1], [0], [0], [0, 0, 1, 0], [], []>} : vector<34x16xf32>, vector<34x16xf32>, vector<34x34xf32> -> vector<34x34xf32>
    %cst_40 = arith.constant 2.500000e-01 : f32
    %76 = vector.broadcast %cst_40 : f32 to vector<34x34xf32>
    %77 = arith.mulf %75, %76 : vector<34x34xf32>
    %78 = arith.addf %77, %44 : vector<34x34xf32>
    %cst_41 = arith.constant dense<0xFF800000> : vector<34xf32>
    %79 = vector.multi_reduction <maximumf>, %78, %cst_41 [1] : vector<34x34xf32> to vector<34xf32>
    %80 = vector.shape_cast %79 : vector<34xf32> to vector<34x1xf32>
    %81 = vector.broadcast %80 : vector<34x1xf32> to vector<34x34xf32>
    %82 = arith.subf %78, %81 : vector<34x34xf32>
    %83 = math.exp %82 : vector<34x34xf32>
    %cst_42 = arith.constant dense<0.000000e+00> : vector<34xf32>
    %84 = vector.multi_reduction <add>, %83, %cst_42 [1] : vector<34x34xf32> to vector<34xf32>
    %85 = vector.shape_cast %84 : vector<34xf32> to vector<34x1xf32>
    %86 = vector.broadcast %85 : vector<34x1xf32> to vector<34x34xf32>
    %87 = arith.divf %83, %86 : vector<34x34xf32>
    %c16_i32_43 = arith.constant 16 : i32
    %88 = vector.broadcast %c16_i32_43 : i32 to vector<1x32xi32>
    %89 = arith.cmpi sge, %45, %88 : vector<1x32xi32>
    %c32_i32 = arith.constant 32 : i32
    %90 = vector.broadcast %c32_i32 : i32 to vector<1x32xi32>
    %91 = arith.cmpi slt, %45, %90 : vector<1x32xi32>
    %92 = arith.andi %89, %91 : vector<1x32xi1>
    %cst_44 = arith.constant 0.000000e+00 : f32
    %93 = vector.shape_cast %92 : vector<1x32xi1> to vector<1x32xi1>
    %94 = vector.broadcast %93 : vector<1x32xi1> to vector<34x32xi1>
    %95 = vector.broadcast %cst_44 : f32 to vector<34x32xf32>
    %96 = arith.select %94, %43, %95 : vector<34x32xi1>, vector<34x32xf32>
    %cst_45 = arith.constant dense<0.000000e+00> : vector<34x32xf32>
    %97 = tpu.matmul %87, %96, %cst_45 {dimension_numbers = #tpu.dot_dimension_numbers<[1], [0], [0], [1], [0, 0, 1, 1], [], []>} : vector<34x34xf32>, vector<34x32xf32>, vector<34x32xf32> -> vector<34x32xf32>
    %98 = arith.addf %72, %97 : vector<34x32xf32>
    %99 = arith.addf %9, %98 : vector<34x32xf32>
    %c0_46 = arith.constant 0 : index
    %c0_47 = arith.constant 0 : index
    %100 = vector.load %arg9[%c0_46, %c0_47] : memref<34x32xf32, #tpu.memory_space<vmem>>, vector<34x32xf32>
    tpu.vector_store %arg9[%c0_46, %c0_47], %99 {strides = array<i32>} : memref<34x32xf32, #tpu.memory_space<vmem>>, vector<34x32xf32>,
    return
  }
  func.func @transform_0(%arg0: i32) -> (i32, i32) {
    %c0_i32 = arith.constant 0 : i32
    %c0_i32_0 = arith.constant 0 : i32
    return %arg0, %c0_i32 : i32, i32
  }
  func.func @transform_1(%arg0: i32) -> (i32, i32) {
    %c0_i32 = arith.constant 0 : i32
    %c0_i32_0 = arith.constant 0 : i32
    %c0_i32_1 = arith.constant 0 : i32
    return %c0_i32, %c0_i32_0 : i32, i32
  }
  func.func @transform_2(%arg0: i32) -> (i32, i32, i32) {
    %c0_i32 = arith.constant 0 : i32
    %c0_i32_0 = arith.constant 0 : i32
    %c0_i32_1 = arith.constant 0 : i32
    %c0_i32_2 = arith.constant 0 : i32
    return %c0_i32, %c0_i32_0, %c0_i32_1 : i32, i32, i32
  }
  func.func @transform_3(%arg0: i32) -> (i32, i32) {
    %c0_i32 = arith.constant 0 : i32
    %c0_i32_0 = arith.constant 0 : i32
    %c0_i32_1 = arith.constant 0 : i32
    return %c0_i32, %c0_i32_0 : i32, i32
  }
  func.func @transform_4(%arg0: i32) -> (i32, i32) {
    %c0_i32 = arith.constant 0 : i32
    %c0_i32_0 = arith.constant 0 : i32
    %c0_i32_1 = arith.constant 0 : i32
    return %c0_i32, %c0_i32_0 : i32, i32
  }
  func.func @transform_5(%arg0: i32) -> (i32, i32) {
    %c0_i32 = arith.constant 0 : i32
    %c0_i32_0 = arith.constant 0 : i32
    %c0_i32_1 = arith.constant 0 : i32
    return %c0_i32, %c0_i32_0 : i32, i32
  }
  func.func @transform_6(%arg0: i32) -> (i32, i32) {
    %c0_i32 = arith.constant 0 : i32
    %c0_i32_0 = arith.constant 0 : i32
    %c0_i32_1 = arith.constant 0 : i32
    return %c0_i32, %c0_i32_0 : i32, i32
  }
  func.func @transform_7(%arg0: i32) -> (i32, i32) {
    %c0_i32 = arith.constant 0 : i32
    %c0_i32_0 = arith.constant 0 : i32
    %c0_i32_1 = arith.constant 0 : i32
    return %c0_i32, %c0_i32_0 : i32, i32
  }
  func.func @transform_8(%arg0: i32) -> (i32, i32) {
    %c0_i32 = arith.constant 0 : i32
    %c0_i32_0 = arith.constant 0 : i32
    return %arg0, %c0_i32 : i32, i32
  }
}

</mosaic_0001>

<llo_original>
// kernel: tpu_custom_call.1
$region0: #{tpu_custom_call.1}
  #allocation0 [shape = 'u32[]', space=smem, size = 0x4, offset = 0x4, fixed_abs, tag = 'smem constant byte address 0x4 - core index']
  #allocation1 [shape = 'u32[144,128]{1,0:T(1,128)}', space=vmem, size = 0x12000, scoped, tag = 'internal scratch']
  %s0 = inlined_call_operand.vmem [shape: f32[34,64], index: 0, kind: input, shape index: {}]
  %s1 = inlined_call_operand.vmem [shape: f32[64,32], index: 1, kind: input, shape index: {}]
  %s2 = inlined_call_operand.vmem [shape: f32[3,34,32], index: 2, kind: input, shape index: {}]
  %s3 = inlined_call_operand.vmem [shape: f32[32,96], index: 3, kind: input, shape index: {}]
  %s4 = inlined_call_operand.vmem [shape: f32[1,96], index: 4, kind: input, shape index: {}]
  %s5 = inlined_call_operand.vmem [shape: f32[2,34], index: 5, kind: input, shape index: {}]
  %s6 = inlined_call_operand.vmem [shape: f32[34,2], index: 6, kind: input, shape index: {}]
  %s7 = inlined_call_operand.vmem [shape: f32[34,34], index: 7, kind: input, shape index: {}]
  %s8 = inlined_call_operand.vmem [shape: f32[34,32], index: 8, kind: output, shape index: {}]
  %s9 = sld [smem:[#allocation0]]
  $region42: #{tpu_custom_call.1} parent=0
    _
  %s11 = ssub.s32 1, %s9
  %s12 = scalar_select 0, %s11, %s9
  // Predicated region
  $region2: #{tpu_custom_call.1} parent=0 // pred_check
    _
  $region3: #{tpu_custom_call.1} parent=0 // pred_check_branch
    %14 = sbr.rel (0) target = $region5
  $region4: #{tpu_custom_call.1} parent=0 // pred_region
    _
  $region5: #{tpu_custom_call.1} parent=0 // pred_fallthru
    _
  // Predicated region
  $region6: #{tpu_custom_call.1} parent=0 // pred_check
    _
  $region7: #{tpu_custom_call.1} parent=0 // pred_check_branch
    %16 = sbr.rel (0) target = $region9
  $region8: #{tpu_custom_call.1} parent=0 // pred_region
    _
  $region9: #{tpu_custom_call.1} parent=0 // pred_fallthru
    _
  // Predicated region
  $region10: #{tpu_custom_call.1} parent=0 // pred_check
    _
  $region11: #{tpu_custom_call.1} parent=0 // pred_check_branch
    %18 = sbr.rel (0) target = $region13
  $region12: #{tpu_custom_call.1} parent=0 // pred_region
    _
  $region13: #{tpu_custom_call.1} parent=0 // pred_fallthru
    _
  // Predicated region
  $region14: #{tpu_custom_call.1} parent=0 // pred_check
    _
  $region15: #{tpu_custom_call.1} parent=0 // pred_check_branch
    %20 = sbr.rel (0) target = $region17
  $region16: #{tpu_custom_call.1} parent=0 // pred_region
    _
  $region17: #{tpu_custom_call.1} parent=0 // pred_fallthru
    _
  // Predicated region
  $region18: #{tpu_custom_call.1} parent=0 // pred_check
    _
  $region19: #{tpu_custom_call.1} parent=0 // pred_check_branch
    %22 = sbr.rel (0) target = $region21
  $region20: #{tpu_custom_call.1} parent=0 // pred_region
    _
  $region21: #{tpu_custom_call.1} parent=0 // pred_fallthru
    _
  // Predicated region
  $region22: #{tpu_custom_call.1} parent=0 // pred_check
    _
  $region23: #{tpu_custom_call.1} parent=0 // pred_check_branch
    %24 = sbr.rel (0) target = $region25
  $region24: #{tpu_custom_call.1} parent=0 // pred_region
    _
  $region25: #{tpu_custom_call.1} parent=0 // pred_fallthru
    _
  // Predicated region
  $region26: #{tpu_custom_call.1} parent=0 // pred_check
    _
  $region27: #{tpu_custom_call.1} parent=0 // pred_check_branch
    %26 = sbr.rel (0) target = $region29
  $region28: #{tpu_custom_call.1} parent=0 // pred_region
    _
  $region29: #{tpu_custom_call.1} parent=0 // pred_fallthru
    _
  // Predicated region
  $region30: #{tpu_custom_call.1} parent=0 // pred_check
    _
  $region31: #{tpu_custom_call.1} parent=0 // pred_check_branch
    %28 = sbr.rel (0) target = $region33
  $region32: #{tpu_custom_call.1} parent=0 // pred_region
    _
  $region33: #{tpu_custom_call.1} parent=0 // pred_fallthru
    _
  %v29 = vld [vmem:[%s2] sm:$0xff]
  %v30 = vld [vmem:[%s2 + $0x8] sm:$0xff]
  %v31 = vld [vmem:[%s2 + $0x10] sm:$0xff]
  %v32 = vld [vmem:[%s2 + $0x18] sm:$0xff]
  %v33 = vld [vmem:[%s2 + $0x20] sm:$0x3]
  %s34 = scalar_lea.vmem %s2, 40
  %v35 = vld [vmem:[%s34] sm:$0xff]
  %v36 = vld [vmem:[%s34 + $0x8] sm:$0xff]
  %v37 = vld [vmem:[%s34 + $0x10] sm:$0xff]
  %v38 = vld [vmem:[%s34 + $0x18] sm:$0xff]
  %v39 = vld [vmem:[%s34 + $0x20] sm:$0x3]
  %s40 = scalar_lea.vmem %s2, 80
  %v41 = vld [vmem:[%s40] sm:$0xff]
  %v42 = vld [vmem:[%s40 + $0x8] sm:$0xff]
  %v43 = vld [vmem:[%s40 + $0x10] sm:$0xff]
  %v44 = vld [vmem:[%s40 + $0x18] sm:$0xff]
  %v45 = vld [vmem:[%s40 + $0x20] sm:$0x3]
  %v46 = vld [vmem:[%s0] sm:$0xff]
  %v47 = vld [vmem:[%s0 + $0x8] sm:$0xff]
  %v48 = vld [vmem:[%s0 + $0x10] sm:$0xff]
  %v49 = vld [vmem:[%s0 + $0x18] sm:$0xff]
  %v50 = vld [vmem:[%s0 + $0x20] sm:$0x3]
  %v51 = vld [vmem:[%s1] sm:$0xff]
  %v52 = vld [vmem:[%s1 + $0x8] sm:$0xff]
  %v53 = vld [vmem:[%s1 + $0x10] sm:$0xff]
  %v54 = vld [vmem:[%s1 + $0x18] sm:$0xff]
  %v55 = vld [vmem:[%s1 + $0x20] sm:$0xff]
  %v56 = vld [vmem:[%s1 + $0x28] sm:$0xff]
  %v57 = vld [vmem:[%s1 + $0x30] sm:$0xff]
  %v58 = vld [vmem:[%s1 + $0x38] sm:$0xff]
  %vm59 = vcmask 523264
  %v61 = vsel %vm59, %v46, 0
  %v64 = vsel %vm59, %v47, 0
  %v67 = vsel %vm59, %v48, 0
  %v70 = vsel %vm59, %v49, 0
  %v73 = vsel %vm59, %v50, 0
  %75 = vmatprep.subr.mxu0 0.0
  %76 = vmatpush1.msra.mxu0 %v51
  %77 = vmatprep.subr.mxu0 0.0
  %78 = vmatpush1.msra.mxu0 %v52
  %79 = vmatprep.subr.mxu0 0.0
  %80 = vmatpush1.msra.mxu0 %v53
  %81 = vmatprep.subr.mxu0 0.0
  %82 = vmatpush1.msra.mxu0 %v54
  %83 = vmatprep.subr.mxu0 0.0
  %84 = vmatpush1.msra.mxu0 %v55
  %85 = vmatprep.subr.mxu0 0.0
  %86 = vmatpush1.msra.mxu0 %v56
  %87 = vmatprep.subr.mxu0 0.0
  %88 = vmatpush1.msra.mxu0 %v57
  %89 = vmatprep.subr.mxu0 0.0
  %90 = vmatpush1.msra.mxu0 %v58
  %91 = vmatprep.subr.mxu0 0.0
  %92 = vmatpush1.msra.mxu0 0.0
  %93 = vmatprep.subr.mxu0 0.0
  %94 = vmatpush1.msra.mxu0 0.0
  %95 = vmatprep.subr.mxu0 0.0
  %96 = vmatpush1.msra.mxu0 0.0
  %97 = vmatprep.subr.mxu0 0.0
  %98 = vmatpush1.msra.mxu0 0.0
  %99 = vmatprep.subr.mxu0 0.0
  %100 = vmatpush1.msra.mxu0 0.0
  %101 = vmatprep.subr.mxu0 0.0
  %102 = vmatpush1.msra.mxu0 0.0
  %103 = vmatprep.subr.mxu0 0.0
  %104 = vmatpush1.msra.mxu0 0.0
  %105 = vmatprep.subr.mxu0 0.0
  %106 = vmatpush1.msra.mxu0 0.0
  %107 = vmatprep.subr.mxu0 0.0
  %108 = vmatpush1.msra.mxu0 0.0
  %109 = vmatprep.subr.mxu0 0.0
  %110 = vmatpush1.msra.mxu0 0.0
  %111 = vmatprep.subr.mxu0 0.0
  %112 = vmatpush1.msra.mxu0 0.0
  %113 = vmatprep.subr.mxu0 0.0
  %114 = vmatpush1.msra.mxu0 0.0
  %115 = vmatprep.subr.mxu0 0.0
  %116 = vmatpush1.msra.mxu0 0.0
  %117 = vmatprep.subr.mxu0 0.0
  %118 = vmatpush1.msra.mxu0 0.0
  %119 = vmatprep.subr.mxu0 0.0
  %120 = vmatpush1.msra.mxu0 0.0
  %121 = vmatprep.subr.mxu0 0.0
  %122 = vmatpush1.msra.mxu0 0.0
  %123 = vmatprep.subr.mxu0 0.0
  %124 = vmatpush1.msra.mxu0 0.0
  %125 = vmatprep.subr.mxu0 0.0
  %126 = vmatpush1.msra.mxu0 0.0
  %127 = vmatprep.subr.mxu0 0.0
  %128 = vmatpush1.msra.mxu0 0.0
  %129 = vmatprep.subr.mxu0 0.0
  %130 = vmatpush1.msra.mxu0 0.0
  %131 = vmatprep.subr.mxu0 0.0
  %132 = vmatpush1.msra.mxu0 0.0
  %133 = vmatprep.subr.mxu0 0.0
  %134 = vmatpush1.msra.mxu0 0.0
  %135 = vmatprep.subr.mxu0 0.0
  %136 = vmatpush1.msra.mxu0 0.0
  %137 = vmatprep.subr.mxu0 0.0
  %138 = vmatpush1.msra.mxu0 0.0
  %139 = vmatprep.mubr.f32.mxu0 0.0
  %140 = vmatmul.mubr.f32.gmra.mrb[0].mxu0 %v61
  %v141 = vpop.f32.mrb[0].mxu0
  %v142 = vadd.f32 %v29, %v141
  %v143 = vpop.f32.mrb[0].mxu0
  %144 = vmatprep.mubr.f32.mxu0 0.0
  %145 = vmatmul.mubr.f32.gmra.mrb[0].mxu0 %v64
  %v146 = vpop.f32.mrb[0].mxu0
  %v147 = vadd.f32 %v30, %v146
  %v148 = vpop.f32.mrb[0].mxu0
  %149 = vmatprep.mubr.f32.mxu0 0.0
  %150 = vmatmul.mubr.f32.gmra.mrb[0].mxu0 %v67
  %v151 = vpop.f32.mrb[0].mxu0
  %v152 = vadd.f32 %v31, %v151
  %v153 = vpop.f32.mrb[0].mxu0
  %154 = vmatprep.mubr.f32.mxu0 0.0
  %155 = vmatmul.mubr.f32.gmra.mrb[0].mxu0 %v70
  %v156 = vpop.f32.mrb[0].mxu0
  %v157 = vadd.f32 %v32, %v156
  %v158 = vpop.f32.mrb[0].mxu0
  %159 = vmatprep.mubr.f32.mxu0 0.0
  %160 = vmatmul.mubr.f32.gmra.mrb[0].mxu0 %v73
  %v161 = vpop.f32.mrb[0].mxu0
  %v162 = vadd.f32 %v33, %v161
  %v163 = vpop.f32.mrb[0].mxu0
  %164 = vdwg.mxu0
  %v165 = vld [vmem:[%s5] sm:$0x3]
  %v166 = vld [vmem:[%s6] sm:$0xff]
  %v167 = vld [vmem:[%s6 + $0x8] sm:$0xff]
  %v168 = vld [vmem:[%s6 + $0x10] sm:$0xff]
  %v169 = vld [vmem:[%s6 + $0x18] sm:$0xff]
  %v170 = vld [vmem:[%s6 + $0x20] sm:$0x3]
  %vm171 = vcmask 277504
  %v173 = vsel %vm171, %v165, 0
  %vm175 = vcmask 1041408
  %v177 = vsel %vm175, %v162, 0
  %179 = vmatprep.subr.mxu0 0.0
  %180 = vmatpush1.msra.mxu0 %v142
  %181 = vmatprep.subr.mxu0 0.0
  %182 = vmatpush1.msra.mxu0 %v147
  %183 = vmatprep.subr.mxu0 0.0
  %184 = vmatpush1.msra.mxu0 %v152
  %185 = vmatprep.subr.mxu0 0.0
  %186 = vmatpush1.msra.mxu0 %v157
  %187 = vmatprep.subr.mxu0 0.0
  %188 = vmatpush1.msra.mxu0 %v177
  %189 = vmatprep.subr.mxu0 0.0
  %190 = vmatpush1.msra.mxu0 0.0
  %191 = vmatprep.subr.mxu0 0.0
  %192 = vmatpush1.msra.mxu0 0.0
  %193 = vmatprep.subr.mxu0 0.0
  %194 = vmatpush1.msra.mxu0 0.0
  %195 = vmatprep.subr.mxu0 0.0
  %196 = vmatpush1.msra.mxu0 0.0
  %197 = vmatprep.subr.mxu0 0.0
  %198 = vmatpush1.msra.mxu0 0.0
  %199 = vmatprep.subr.mxu0 0.0
  %200 = vmatpush1.msra.mxu0 0.0
  %201 = vmatprep.subr.mxu0 0.0
  %202 = vmatpush1.msra.mxu0 0.0
  %203 = vmatprep.subr.mxu0 0.0
  %204 = vmatpush1.msra.mxu0 0.0
  %205 = vmatprep.subr.mxu0 0.0
  %206 = vmatpush1.msra.mxu0 0.0
  %207 = vmatprep.subr.mxu0 0.0
  %208 = vmatpush1.msra.mxu0 0.0
  %209 = vmatprep.subr.mxu0 0.0
  %210 = vmatpush1.msra.mxu0 0.0
  %211 = vmatprep.subr.mxu0 0.0
  %212 = vmatpush1.msra.mxu0 0.0
  %213 = vmatprep.subr.mxu0 0.0
  %214 = vmatpush1.msra.mxu0 0.0
  %215 = vmatprep.subr.mxu0 0.0
  %216 = vmatpush1.msra.mxu0 0.0
  %217 = vmatprep.subr.mxu0 0.0
  %218 = vmatpush1.msra.mxu0 0.0
  %219 = vmatprep.subr.mxu0 0.0
  %220 = vmatpush1.msra.mxu0 0.0
  %221 = vmatprep.subr.mxu0 0.0
  %222 = vmatpush1.msra.mxu0 0.0
  %223 = vmatprep.subr.mxu0 0.0
  %224 = vmatpush1.msra.mxu0 0.0
  %225 = vmatprep.subr.mxu0 0.0
  %226 = vmatpush1.msra.mxu0 0.0
  %227 = vmatprep.subr.mxu0 0.0
  %228 = vmatpush1.msra.mxu0 0.0
  %229 = vmatprep.subr.mxu0 0.0
  %230 = vmatpush1.msra.mxu0 0.0
  %231 = vmatprep.subr.mxu0 0.0
  %232 = vmatpush1.msra.mxu0 0.0
  %233 = vmatprep.subr.mxu0 0.0
  %234 = vmatpush1.msra.mxu0 0.0
  %235 = vmatprep.subr.mxu0 0.0
  %236 = vmatpush1.msra.mxu0 0.0
  %237 = vmatprep.subr.mxu0 0.0
  %238 = vmatpush1.msra.mxu0 0.0
  %239 = vmatprep.subr.mxu0 0.0
  %240 = vmatpush1.msra.mxu0 0.0
  %241 = vmatprep.subr.mxu0 0.0
  %242 = vmatpush1.msra.mxu0 0.0
  %243 = vmatprep.mubr.f32.mxu0 0.0
  %244 = vmatmul.mubr.f32.gmra.mrb[0].mxu0 %v173
  %v245 = vpop.f32.mrb[0].mxu0
  %v246 = vadd.f32 0.0, %v245
  %v247 = vpop.f32.mrb[0].mxu0
  %248 = vdwg.mxu0
  %vm249 = vcmask 15360
  %v251 = vsel %vm249, %v166, 0
  %v254 = vsel %vm249, %v167, 0
  %v257 = vsel %vm249, %v168, 0
  %v260 = vsel %vm249, %v169, 0
  %v263 = vsel %vm249, %v170, 0
  %v266 = vsel %vm175, %v246, 0
  %268 = vmatprep.subr.mxu0 0.0
  %269 = vmatpush1.msra.mxu0 %v266
  %270 = vmatprep.subr.mxu0 0.0
  %271 = vmatpush1.msra.mxu0 0.0
  %272 = vmatprep.subr.mxu0 0.0
  %273 = vmatpush1.msra.mxu0 0.0
  %274 = vmatprep.subr.mxu0 0.0
  %275 = vmatpush1.msra.mxu0 0.0
  %276 = vmatprep.subr.mxu0 0.0
  %277 = vmatpush1.msra.mxu0 0.0
  %278 = vmatprep.subr.mxu0 0.0
  %279 = vmatpush1.msra.mxu0 0.0
  %280 = vmatprep.subr.mxu0 0.0
  %281 = vmatpush1.msra.mxu0 0.0
  %282 = vmatprep.subr.mxu0 0.0
  %283 = vmatpush1.msra.mxu0 0.0
  %284 = vmatprep.subr.mxu0 0.0
  %285 = vmatpush1.msra.mxu0 0.0
  %286 = vmatprep.subr.mxu0 0.0
  %287 = vmatpush1.msra.mxu0 0.0
  %288 = vmatprep.subr.mxu0 0.0
  %289 = vmatpush1.msra.mxu0 0.0
  %290 = vmatprep.subr.mxu0 0.0
  %291 = vmatpush1.msra.mxu0 0.0
  %292 = vmatprep.subr.mxu0 0.0
  %293 = vmatpush1.msra.mxu0 0.0
  %294 = vmatprep.subr.mxu0 0.0
  %295 = vmatpush1.msra.mxu0 0.0
  %296 = vmatprep.subr.mxu0 0.0
  %297 = vmatpush1.msra.mxu0 0.0
  %298 = vmatprep.subr.mxu0 0.0
  %299 = vmatpush1.msra.mxu0 0.0
  %300 = vmatprep.subr.mxu0 0.0
  %301 = vmatpush1.msra.mxu0 0.0
  %302 = vmatprep.subr.mxu0 0.0
  %303 = vmatpush1.msra.mxu0 0.0
  %304 = vmatprep.subr.mxu0 0.0
  %305 = vmatpush1.msra.mxu0 0.0
  %306 = vmatprep.subr.mxu0 0.0
  %307 = vmatpush1.msra.mxu0 0.0
  %308 = vmatprep.subr.mxu0 0.0
  %309 = vmatpush1.msra.mxu0 0.0
  %310 = vmatprep.subr.mxu0 0.0
  %311 = vmatpush1.msra.mxu0 0.0
  %312 = vmatprep.subr.mxu0 0.0
  %313 = vmatpush1.msra.mxu0 0.0
  %314 = vmatprep.subr.mxu0 0.0
  %315 = vmatpush1.msra.mxu0 0.0
  %316 = vmatprep.subr.mxu0 0.0
  %317 = vmatpush1.msra.mxu0 0.0
  %318 = vmatprep.subr.mxu0 0.0
  %319 = vmatpush1.msra.mxu0 0.0
  %320 = vmatprep.subr.mxu0 0.0
  %321 = vmatpush1.msra.mxu0 0.0
  %322 = vmatprep.subr.mxu0 0.0
  %323 = vmatpush1.msra.mxu0 0.0
  %324 = vmatprep.subr.mxu0 0.0
  %325 = vmatpush1.msra.mxu0 0.0
  %326 = vmatprep.subr.mxu0 0.0
  %327 = vmatpush1.msra.mxu0 0.0
  %328 = vmatprep.subr.mxu0 0.0
  %329 = vmatpush1.msra.mxu0 0.0
  %330 = vmatprep.subr.mxu0 0.0
  %331 = vmatpush1.msra.mxu0 0.0
  %332 = vmatprep.mubr.f32.mxu0 0.0
  %333 = vmatmul.mubr.f32.gmra.mrb[0].mxu0 %v251
  %v334 = vpop.f32.mrb[0].mxu0
  %v335 = vadd.f32 0.0, %v334
  %v336 = vpop.f32.mrb[0].mxu0
  %337 = vmatprep.mubr.f32.mxu0 0.0
  %338 = vmatmul.mubr.f32.gmra.mrb[0].mxu0 %v254
  %v339 = vpop.f32.mrb[0].mxu0
  %v340 = vadd.f32 0.0, %v339
  %v341 = vpop.f32.mrb[0].mxu0
  %342 = vmatprep.mubr.f32.mxu0 0.0
  %343 = vmatmul.mubr.f32.gmra.mrb[0].mxu0 %v257
  %v344 = vpop.f32.mrb[0].mxu0
  %v345 = vadd.f32 0.0, %v344
  %v346 = vpop.f32.mrb[0].mxu0
  %347 = vmatprep.mubr.f32.mxu0 0.0
  %348 = vmatmul.mubr.f32.gmra.mrb[0].mxu0 %v260
  %v349 = vpop.f32.mrb[0].mxu0
  %v350 = vadd.f32 0.0, %v349
  %v351 = vpop.f32.mrb[0].mxu0
  %352 = vmatprep.mubr.f32.mxu0 0.0
  %353 = vmatmul.mubr.f32.gmra.mrb[0].mxu0 %v263
  %v354 = vpop.f32.mrb[0].mxu0
  %v355 = vadd.f32 0.0, %v354
  %v356 = vpop.f32.mrb[0].mxu0
  %357 = vdwg.mxu0
  %v358 = vmul.f32 %v335, 0.05882353
  %v359 = vmul.f32 %v340, 0.05882353
  %v360 = vmul.f32 %v345, 0.05882353
  %v361 = vmul.f32 %v350, 0.05882353
  %v362 = vmul.f32 %v355, 0.05882353
  %vm363 = vcmask 261120
  %v364 = vsel %vm363, %v358, 0.0
  %365 = vadd.xlane.f32.xlu0 %v364
  %v366 = vpop.xlane.xlu0 %365
  %v367 = vsel %vm363, %v359, 0.0
  %368 = vadd.xlane.f32.xlu0 %v367
  %v369 = vpop.xlane.xlu0 %368
  %v370 = vsel %vm363, %v360, 0.0
  %371 = vadd.xlane.f32.xlu0 %v370
  %v372 = vpop.xlane.xlu0 %371
  %v373 = vsel %vm363, %v361, 0.0
  %374 = vadd.xlane.f32.xlu0 %v373
  %v375 = vpop.xlane.xlu0 %374
  %vm376 = vcmask 254976
  %v377 = vsel %vm376, %v362, 0.0
  %378 = vadd.xlane.f32.xlu0 %v377
  %v379 = vpop.xlane.xlu0 %378
  %v380 = vrcp.pop 32.0
  %v381 = vmul.f32 %v366, %v380
  %v382 = vmul.f32 %v369, %v380
  %v383 = vmul.f32 %v372, %v380
  %v384 = vmul.f32 %v375, %v380
  %v385 = vmul.f32 %v379, %v380
  %v386 = vsub.f32 %v142, %v381
  %v387 = vsub.f32 %v147, %v382
  %v388 = vsub.f32 %v152, %v383
  %v389 = vsub.f32 %v157, %v384
  %v390 = vsub.f32 %v162, %v385
  %v391 = vmul.f32 %v386, %v386
  %v392 = vmul.f32 %v387, %v387
  %v393 = vmul.f32 %v388, %v388
  %v394 = vmul.f32 %v389, %v389
  %v395 = vmul.f32 %v390, %v390
  %v397 = vsel %vm175, %v395, 0
  %399 = vmatprep.subr.mxu0 0.0
  %400 = vmatpush1.msra.mxu0 %v391
  %401 = vmatprep.subr.mxu0 0.0
  %402 = vmatpush1.msra.mxu0 %v392
  %403 = vmatprep.subr.mxu0 0.0
  %404 = vmatpush1.msra.mxu0 %v393
  %405 = vmatprep.subr.mxu0 0.0
  %406 = vmatpush1.msra.mxu0 %v394
  %407 = vmatprep.subr.mxu0 0.0
  %408 = vmatpush1.msra.mxu0 %v397
  %409 = vmatprep.subr.mxu0 0.0
  %410 = vmatpush1.msra.mxu0 0.0
  %411 = vmatprep.subr.mxu0 0.0
  %412 = vmatpush1.msra.mxu0 0.0
  %413 = vmatprep.subr.mxu0 0.0
  %414 = vmatpush1.msra.mxu0 0.0
  %415 = vmatprep.subr.mxu0 0.0
  %416 = vmatpush1.msra.mxu0 0.0
  %417 = vmatprep.subr.mxu0 0.0
  %418 = vmatpush1.msra.mxu0 0.0
  %419 = vmatprep.subr.mxu0 0.0
  %420 = vmatpush1.msra.mxu0 0.0
  %421 = vmatprep.subr.mxu0 0.0
  %422 = vmatpush1.msra.mxu0 0.0
  %423 = vmatprep.subr.mxu0 0.0
  %424 = vmatpush1.msra.mxu0 0.0
  %425 = vmatprep.subr.mxu0 0.0
  %426 = vmatpush1.msra.mxu0 0.0
  %427 = vmatprep.subr.mxu0 0.0
  %428 = vmatpush1.msra.mxu0 0.0
  %429 = vmatprep.subr.mxu0 0.0
  %430 = vmatpush1.msra.mxu0 0.0
  %431 = vmatprep.subr.mxu0 0.0
  %432 = vmatpush1.msra.mxu0 0.0
  %433 = vmatprep.subr.mxu0 0.0
  %434 = vmatpush1.msra.mxu0 0.0
  %435 = vmatprep.subr.mxu0 0.0
  %436 = vmatpush1.msra.mxu0 0.0
  %437 = vmatprep.subr.mxu0 0.0
  %438 = vmatpush1.msra.mxu0 0.0
  %439 = vmatprep.subr.mxu0 0.0
  %440 = vmatpush1.msra.mxu0 0.0
  %441 = vmatprep.subr.mxu0 0.0
  %442 = vmatpush1.msra.mxu0 0.0
  %443 = vmatprep.subr.mxu0 0.0
  %444 = vmatpush1.msra.mxu0 0.0
  %445 = vmatprep.subr.mxu0 0.0
  %446 = vmatpush1.msra.mxu0 0.0
  %447 = vmatprep.subr.mxu0 0.0
  %448 = vmatpush1.msra.mxu0 0.0
  %449 = vmatprep.subr.mxu0 0.0
  %450 = vmatpush1.msra.mxu0 0.0
  %451 = vmatprep.subr.mxu0 0.0
  %452 = vmatpush1.msra.mxu0 0.0
  %453 = vmatprep.subr.mxu0 0.0
  %454 = vmatpush1.msra.mxu0 0.0
  %455 = vmatprep.subr.mxu0 0.0
  %456 = vmatpush1.msra.mxu0 0.0
  %457 = vmatprep.subr.mxu0 0.0
  %458 = vmatpush1.msra.mxu0 0.0
  %459 = vmatprep.subr.mxu0 0.0
  %460 = vmatpush1.msra.mxu0 0.0
  %461 = vmatprep.subr.mxu0 0.0
  %462 = vmatpush1.msra.mxu0 0.0
  %463 = vmatprep.mubr.f32.mxu0 0.0
  %464 = vmatmul.mubr.f32.gmra.mrb[0].mxu0 %v173
  %v465 = vpop.f32.mrb[0].mxu0
  %v466 = vadd.f32 0.0, %v465
  %v467 = vpop.f32.mrb[0].mxu0
  %468 = vdwg.mxu0
  %v470 = vsel %vm175, %v466, 0
  %472 = vmatprep.subr.mxu0 0.0
  %473 = vmatpush1.msra.mxu0 %v470
  %474 = vmatprep.subr.mxu0 0.0
  %475 = vmatpush1.msra.mxu0 0.0
  %476 = vmatprep.subr.mxu0 0.0
  %477 = vmatpush1.msra.mxu0 0.0
  %478 = vmatprep.subr.mxu0 0.0
  %479 = vmatpush1.msra.mxu0 0.0
  %480 = vmatprep.subr.mxu0 0.0
  %481 = vmatpush1.msra.mxu0 0.0
  %482 = vmatprep.subr.mxu0 0.0
  %483 = vmatpush1.msra.mxu0 0.0
  %484 = vmatprep.subr.mxu0 0.0
  %485 = vmatpush1.msra.mxu0 0.0
  %486 = vmatprep.subr.mxu0 0.0
  %487 = vmatpush1.msra.mxu0 0.0
  %488 = vmatprep.subr.mxu0 0.0
  %489 = vmatpush1.msra.mxu0 0.0
  %490 = vmatprep.subr.mxu0 0.0
  %491 = vmatpush1.msra.mxu0 0.0
  %492 = vmatprep.subr.mxu0 0.0
  %493 = vmatpush1.msra.mxu0 0.0
  %494 = vmatprep.subr.mxu0 0.0
  %495 = vmatpush1.msra.mxu0 0.0
  %496 = vmatprep.subr.mxu0 0.0
  %497 = vmatpush1.msra.mxu0 0.0
  %498 = vmatprep.subr.mxu0 0.0
  %499 = vmatpush1.msra.mxu0 0.0
  %500 = vmatprep.subr.mxu0 0.0
  %501 = vmatpush1.msra.mxu0 0.0
  %502 = vmatprep.subr.mxu0 0.0
  %503 = vmatpush1.msra.mxu0 0.0
  %504 = vmatprep.subr.mxu0 0.0
  %505 = vmatpush1.msra.mxu0 0.0
  %506 = vmatprep.subr.mxu0 0.0
  %507 = vmatpush1.msra.mxu0 0.0
  %508 = vmatprep.subr.mxu0 0.0
  %509 = vmatpush1.msra.mxu0 0.0
  %510 = vmatprep.subr.mxu0 0.0
  %511 = vmatpush1.msra.mxu0 0.0
  %512 = vmatprep.subr.mxu0 0.0
  %513 = vmatpush1.msra.mxu0 0.0
  %514 = vmatprep.subr.mxu0 0.0
  %515 = vmatpush1.msra.mxu0 0.0
  %516 = vmatprep.subr.mxu0 0.0
  %517 = vmatpush1.msra.mxu0 0.0
  %518 = vmatprep.subr.mxu0 0.0
  %519 = vmatpush1.msra.mxu0 0.0
  %520 = vmatprep.subr.mxu0 0.0
  %521 = vmatpush1.msra.mxu0 0.0
  %522 = vmatprep.subr.mxu0 0.0
  %523 = vmatpush1.msra.mxu0 0.0
  %524 = vmatprep.subr.mxu0 0.0
  %525 = vmatpush1.msra.mxu0 0.0
  %526 = vmatprep.subr.mxu0 0.0
  %527 = vmatpush1.msra.mxu0 0.0
  %528 = vmatprep.subr.mxu0 0.0
  %529 = vmatpush1.msra.mxu0 0.0
  %530 = vmatprep.subr.mxu0 0.0
  %531 = vmatpush1.msra.mxu0 0.0
  %532 = vmatprep.subr.mxu0 0.0
  %533 = vmatpush1.msra.mxu0 0.0
  %534 = vmatprep.subr.mxu0 0.0
  %535 = vmatpush1.msra.mxu0 0.0
  %536 = vmatprep.mubr.f32.mxu0 0.0
  %537 = vmatmul.mubr.f32.gmra.mrb[0].mxu0 %v251
  %v538 = vpop.f32.mrb[0].mxu0
  %v539 = vadd.f32 0.0, %v538
  %v540 = vpop.f32.mrb[0].mxu0
  %541 = vmatprep.mubr.f32.mxu0 0.0
  %542 = vmatmul.mubr.f32.gmra.mrb[0].mxu0 %v254
  %v543 = vpop.f32.mrb[0].mxu0
  %v544 = vadd.f32 0.0, %v543
  %v545 = vpop.f32.mrb[0].mxu0
  %546 = vmatprep.mubr.f32.mxu0 0.0
  %547 = vmatmul.mubr.f32.gmra.mrb[0].mxu0 %v257
  %v548 = vpop.f32.mrb[0].mxu0
  %v549 = vadd.f32 0.0, %v548
  %v550 = vpop.f32.mrb[0].mxu0
  %551 = vmatprep.mubr.f32.mxu0 0.0
  %552 = vmatmul.mubr.f32.gmra.mrb[0].mxu0 %v260
  %v553 = vpop.f32.mrb[0].mxu0
  %v554 = vadd.f32 0.0, %v553
  %v555 = vpop.f32.mrb[0].mxu0
  %556 = vmatprep.mubr.f32.mxu0 0.0
  %557 = vmatmul.mubr.f32.gmra.mrb[0].mxu0 %v263
  %v558 = vpop.f32.mrb[0].mxu0
  %v559 = vadd.f32 0.0, %v558
  %v560 = vpop.f32.mrb[0].mxu0
  %561 = vdwg.mxu0
  %v562 = vmul.f32 %v539, 0.05882353
  %v563 = vmul.f32 %v544, 0.05882353
  %v564 = vmul.f32 %v549, 0.05882353
  %v565 = vmul.f32 %v554, 0.05882353
  %v566 = vmul.f32 %v559, 0.05882353
  %v567 = vsel %vm363, %v562, 0.0
  %568 = vadd.xlane.f32.xlu0 %v567
  %v569 = vpop.xlane.xlu0 %568
  %v570 = vsel %vm363, %v563, 0.0
  %571 = vadd.xlane.f32.xlu0 %v570
  %v572 = vpop.xlane.xlu0 %571
  %v573 = vsel %vm363, %v564, 0.0
  %574 = vadd.xlane.f32.xlu0 %v573
  %v575 = vpop.xlane.xlu0 %574
  %v576 = vsel %vm363, %v565, 0.0
  %577 = vadd.xlane.f32.xlu0 %v576
  %v578 = vpop.xlane.xlu0 %577
  %v579 = vsel %vm376, %v566, 0.0
  %580 = vadd.xlane.f32.xlu0 %v579
  %v581 = vpop.xlane.xlu0 %580
  %v582 = vmul.f32 %v569, %v380
  %v583 = vmul.f32 %v572, %v380
  %v584 = vmul.f32 %v575, %v380
  %v585 = vmul.f32 %v578, %v380
  %v586 = vmul.f32 %v581, %v380
  %v587 = vadd.f32 %v582, 1e-05
  %v588 = vadd.f32 %v583, 1e-05
  %v589 = vadd.f32 %v584, 1e-05
  %v590 = vadd.f32 %v585, 1e-05
  %v591 = vadd.f32 %v586, 1e-05
  %v592 = vrsqrt.pop %v587
  %v593 = vrsqrt.pop %v588
  %v594 = vrsqrt.pop %v589
  %v595 = vrsqrt.pop %v590
  %v596 = vrsqrt.pop %v591
  %v597 = vmul.f32 %v386, %v592
  %v598 = vmul.f32 %v387, %v593
  %v599 = vmul.f32 %v388, %v594
  %v600 = vmul.f32 %v389, %v595
  %v601 = vmul.f32 %v390, %v596
  %v602 = vmul.f32 %v597, %v35
  %v603 = vmul.f32 %v598, %v36
  %v604 = vmul.f32 %v599, %v37
  %v605 = vmul.f32 %v600, %v38
  %v606 = vmul.f32 %v601, %v39
  %v607 = vadd.f32 %v602, %v41
  %v608 = vadd.f32 %v603, %v42
  %v609 = vadd.f32 %v604, %v43
  %v610 = vadd.f32 %v605, %v44
  %v611 = vadd.f32 %v606, %v45
  %v612 = vld [vmem:[%s3] sm:$0xff]
  %v613 = vld [vmem:[%s3 + $0x8] sm:$0xff]
  %v614 = vld [vmem:[%s3 + $0x10] sm:$0xff]
  %v615 = vld [vmem:[%s3 + $0x18] sm:$0xff]
  %v616 = vld [vmem:[%s4] sm:$0x1]
  %v618 = vlaneseq
  %v619 = vshrl.u32 %v618, 7
  %v620 = vsub.s32 0, %v619
  %v621 = vrot.slane %v616, %v620
  %v624 = vsel %vm363, %v607, 0
  %v627 = vsel %vm363, %v608, 0
  %v630 = vsel %vm363, %v609, 0
  %v633 = vsel %vm363, %v610, 0
  %v636 = vsel %vm363, %v611, 0
  %638 = vmatprep.subr.mxu0 0.0
  %639 = vmatpush1.msra.mxu0 %v612
  %640 = vmatprep.subr.mxu0 0.0
  %641 = vmatpush1.msra.mxu0 %v613
  %642 = vmatprep.subr.mxu0 0.0
  %643 = vmatpush1.msra.mxu0 %v614
  %644 = vmatprep.subr.mxu0 0.0
  %645 = vmatpush1.msra.mxu0 %v615
  %646 = vmatprep.subr.mxu0 0.0
  %647 = vmatpush1.msra.mxu0 0.0
  %648 = vmatprep.subr.mxu0 0.0
  %649 = vmatpush1.msra.mxu0 0.0
  %650 = vmatprep.subr.mxu0 0.0
  %651 = vmatpush1.msra.mxu0 0.0
  %652 = vmatprep.subr.mxu0 0.0
  %653 = vmatpush1.msra.mxu0 0.0
  %654 = vmatprep.subr.mxu0 0.0
  %655 = vmatpush1.msra.mxu0 0.0
  %656 = vmatprep.subr.mxu0 0.0
  %657 = vmatpush1.msra.mxu0 0.0
  %658 = vmatprep.subr.mxu0 0.0
  %659 = vmatpush1.msra.mxu0 0.0
  %660 = vmatprep.subr.mxu0 0.0
  %661 = vmatpush1.msra.mxu0 0.0
  %662 = vmatprep.subr.mxu0 0.0
  %663 = vmatpush1.msra.mxu0 0.0
  %664 = vmatprep.subr.mxu0 0.0
  %665 = vmatpush1.msra.mxu0 0.0
  %666 = vmatprep.subr.mxu0 0.0
  %667 = vmatpush1.msra.mxu0 0.0
  %668 = vmatprep.subr.mxu0 0.0
  %669 = vmatpush1.msra.mxu0 0.0
  %670 = vmatprep.subr.mxu0 0.0
  %671 = vmatpush1.msra.mxu0 0.0
  %672 = vmatprep.subr.mxu0 0.0
  %673 = vmatpush1.msra.mxu0 0.0
  %674 = vmatprep.subr.mxu0 0.0
  %675 = vmatpush1.msra.mxu0 0.0
  %676 = vmatprep.subr.mxu0 0.0
  %677 = vmatpush1.msra.mxu0 0.0
  %678 = vmatprep.subr.mxu0 0.0
  %679 = vmatpush1.msra.mxu0 0.0
  %680 = vmatprep.subr.mxu0 0.0
  %681 = vmatpush1.msra.mxu0 0.0
  %682 = vmatprep.subr.mxu0 0.0
  %683 = vmatpush1.msra.mxu0 0.0
  %684 = vmatprep.subr.mxu0 0.0
  %685 = vmatpush1.msra.mxu0 0.0
  %686 = vmatprep.subr.mxu0 0.0
  %687 = vmatpush1.msra.mxu0 0.0
  %688 = vmatprep.subr.mxu0 0.0
  %689 = vmatpush1.msra.mxu0 0.0
  %690 = vmatprep.subr.mxu0 0.0
  %691 = vmatpush1.msra.mxu0 0.0
  %692 = vmatprep.subr.mxu0 0.0
  %693 = vmatpush1.msra.mxu0 0.0
  %694 = vmatprep.subr.mxu0 0.0
  %695 = vmatpush1.msra.mxu0 0.0
  %696 = vmatprep.subr.mxu0 0.0
  %697 = vmatpush1.msra.mxu0 0.0
  %698 = vmatprep.subr.mxu0 0.0
  %699 = vmatpush1.msra.mxu0 0.0
  %700 = vmatprep.subr.mxu0 0.0
  %701 = vmatpush1.msra.mxu0 0.0
  %702 = vmatprep.mubr.f32.mxu0 0.0
  %703 = vmatmul.mubr.f32.gmra.mrb[0].mxu0 %v624
  %v704 = vpop.f32.mrb[0].mxu0
  %v705 = vadd.f32 %v621, %v704
  %v706 = vpop.f32.mrb[0].mxu0
  %707 = vmatprep.mubr.f32.mxu0 0.0
  %708 = vmatmul.mubr.f32.gmra.mrb[0].mxu0 %v627
  %v709 = vpop.f32.mrb[0].mxu0
  %v710 = vadd.f32 %v621, %v709
  %v711 = vpop.f32.mrb[0].mxu0
  %712 = vmatprep.mubr.f32.mxu0 0.0
  %713 = vmatmul.mubr.f32.gmra.mrb[0].mxu0 %v630
  %v714 = vpop.f32.mrb[0].mxu0
  %v715 = vadd.f32 %v621, %v714
  %v716 = vpop.f32.mrb[0].mxu0
  %717 = vmatprep.mubr.f32.mxu0 0.0
  %718 = vmatmul.mubr.f32.gmra.mrb[0].mxu0 %v633
  %v719 = vpop.f32.mrb[0].mxu0
  %v720 = vadd.f32 %v621, %v719
  %v721 = vpop.f32.mrb[0].mxu0
  %722 = vmatprep.mubr.f32.mxu0 0.0
  %723 = vmatmul.mubr.f32.gmra.mrb[0].mxu0 %v636
  %v724 = vpop.f32.mrb[0].mxu0
  %v725 = vadd.f32 %v621, %v724
  %v726 = vpop.f32.mrb[0].mxu0
  %727 = vdwg.mxu0
  %v728 = vld [vmem:[%s7] sm:$0xff]
  %v729 = vld [vmem:[%s7 + $0x8] sm:$0xff]
  %v730 = vld [vmem:[%s7 + $0x10] sm:$0xff]
  %v731 = vld [vmem:[%s7 + $0x18] sm:$0xff]
  %v732 = vld [vmem:[%s7 + $0x20] sm:$0x3]
  %v733 = vlaneseq
  %v734 = vand.u32 %v733, 127
  %740 = vrot.lane.b32.xlu0 %v705, 96
  %v741 = vpop.permute.xlu0 %740
  %742 = vrot.lane.b32.xlu0 %v710, 96
  %v743 = vpop.permute.xlu0 %742
  %744 = vrot.lane.b32.xlu0 %v715, 96
  %v745 = vpop.permute.xlu0 %744
  %746 = vrot.lane.b32.xlu0 %v720, 96
  %v747 = vpop.permute.xlu0 %746
  %748 = vrot.lane.b32.xlu0 %v725, 96
  %v749 = vpop.permute.xlu0 %748
  %vm750 = vcmask 130048
  %v751 = vsel %vm750, %v705, 0
  %v753 = vsel %vm750, %v710, 0
  %v755 = vsel %vm750, %v715, 0
  %v757 = vsel %vm750, %v720, 0
  %v759 = vsel %vm750, %v725, 0
  %v761 = vsel %vm750, %v741, 0
  %v763 = vsel %vm750, %v743, 0
  %v765 = vsel %vm750, %v745, 0
  %v767 = vsel %vm750, %v747, 0
  %v769 = vsel %vm750, %v749, 0
  %771 = vmatprep.subr.mxu0 0.0
  %772 = vmatpush1.xpose.msra.mxu0 %v761
  %773 = vmatprep.subr.mxu0 0.0
  %774 = vmatpush1.xpose.msra.mxu0 %v763
  %775 = vmatprep.subr.mxu0 0.0
  %776 = vmatpush1.xpose.msra.mxu0 %v765
  %777 = vmatprep.subr.mxu0 0.0
  %778 = vmatpush1.xpose.msra.mxu0 %v767
  %779 = vmatprep.subr.mxu0 0.0
  %780 = vmatpush1.xpose.msra.mxu0 %v769
  %781 = vmatprep.subr.mxu0 0.0
  %782 = vmatpush1.xpose.msra.mxu0 0.0
  %783 = vmatprep.subr.mxu0 0.0
  %784 = vmatpush1.xpose.msra.mxu0 0.0
  %785 = vmatprep.subr.mxu0 0.0
  %786 = vmatpush1.xpose.msra.mxu0 0.0
  %787 = vmatprep.subr.mxu0 0.0
  %788 = vmatpush1.xpose.msra.mxu0 0.0
  %789 = vmatprep.subr.mxu0 0.0
  %790 = vmatpush1.xpose.msra.mxu0 0.0
  %791 = vmatprep.subr.mxu0 0.0
  %792 = vmatpush1.xpose.msra.mxu0 0.0
  %793 = vmatprep.subr.mxu0 0.0
  %794 = vmatpush1.xpose.msra.mxu0 0.0
  %795 = vmatprep.subr.mxu0 0.0
  %796 = vmatpush1.xpose.msra.mxu0 0.0
  %797 = vmatprep.subr.mxu0 0.0
  %798 = vmatpush1.xpose.msra.mxu0 0.0
  %799 = vmatprep.subr.mxu0 0.0
  %800 = vmatpush1.xpose.msra.mxu0 0.0
  %801 = vmatprep.subr.mxu0 0.0
  %802 = vmatpush1.xpose.msra.mxu0 0.0
  %803 = vmatprep.subr.mxu0 0.0
  %804 = vmatpush1.xpose.msra.mxu0 0.0
  %805 = vmatprep.subr.mxu0 0.0
  %806 = vmatpush1.xpose.msra.mxu0 0.0
  %807 = vmatprep.subr.mxu0 0.0
  %808 = vmatpush1.xpose.msra.mxu0 0.0
  %809 = vmatprep.subr.mxu0 0.0
  %810 = vmatpush1.xpose.msra.mxu0 0.0
  %811 = vmatprep.subr.mxu0 0.0
  %812 = vmatpush1.xpose.msra.mxu0 0.0
  %813 = vmatprep.subr.mxu0 0.0
  %814 = vmatpush1.xpose.msra.mxu0 0.0
  %815 = vmatprep.subr.mxu0 0.0
  %816 = vmatpush1.xpose.msra.mxu0 0.0
  %817 = vmatprep.subr.mxu0 0.0
  %818 = vmatpush1.xpose.msra.mxu0 0.0
  %819 = vmatprep.subr.mxu0 0.0
  %820 = vmatpush1.xpose.msra.mxu0 0.0
  %821 = vmatprep.subr.mxu0 0.0
  %822 = vmatpush1.xpose.msra.mxu0 0.0
  %823 = vmatprep.subr.mxu0 0.0
  %824 = vmatpush1.xpose.msra.mxu0 0.0
  %825 = vmatprep.subr.mxu0 0.0
  %826 = vmatpush1.xpose.msra.mxu0 0.0
  %827 = vmatprep.subr.mxu0 0.0
  %828 = vmatpush1.xpose.msra.mxu0 0.0
  %829 = vmatprep.subr.mxu0 0.0
  %830 = vmatpush1.xpose.msra.mxu0 0.0
  %831 = vmatprep.subr.mxu0 0.0
  %832 = vmatpush1.xpose.msra.mxu0 0.0
  %833 = vmatprep.subr.mxu0 0.0
  %834 = vmatpush1.xpose.msra.mxu0 0.0
  %835 = vmatprep.mubr.f32.mxu0 0.0
  %836 = vmatmul.mubr.f32.gmra.mrb[0].mxu0 %v751
  %v837 = vpop.f32.mrb[0].mxu0
  %v838 = vadd.f32 0.0, %v837
  %v839 = vpop.f32.mrb[0].mxu0
  %840 = vmatprep.mubr.f32.mxu0 0.0
  %841 = vmatmul.mubr.f32.gmra.mrb[0].mxu0 %v753
  %v842 = vpop.f32.mrb[0].mxu0
  %v843 = vadd.f32 0.0, %v842
  %v844 = vpop.f32.mrb[0].mxu0
  %845 = vmatprep.mubr.f32.mxu0 0.0
  %846 = vmatmul.mubr.f32.gmra.mrb[0].mxu0 %v755
  %v847 = vpop.f32.mrb[0].mxu0
  %v848 = vadd.f32 0.0, %v847
  %v849 = vpop.f32.mrb[0].mxu0
  %850 = vmatprep.mubr.f32.mxu0 0.0
  %851 = vmatmul.mubr.f32.gmra.mrb[0].mxu0 %v757
  %v852 = vpop.f32.mrb[0].mxu0
  %v853 = vadd.f32 0.0, %v852
  %v854 = vpop.f32.mrb[0].mxu0
  %855 = vmatprep.mubr.f32.mxu0 0.0
  %856 = vmatmul.mubr.f32.gmra.mrb[0].mxu0 %v759
  %v857 = vpop.f32.mrb[0].mxu0
  %v858 = vadd.f32 0.0, %v857
  %v859 = vpop.f32.mrb[0].mxu0
  %860 = vdwg.mxu0
  %v861 = vmul.f32 %v838, 0.25
  %v862 = vmul.f32 %v843, 0.25
  %v863 = vmul.f32 %v848, 0.25
  %v864 = vmul.f32 %v853, 0.25
  %v865 = vmul.f32 %v858, 0.25
  %v866 = vadd.f32 %v861, %v728
  %v867 = vadd.f32 %v862, %v729
  %v868 = vadd.f32 %v863, %v730
  %v869 = vadd.f32 %v864, %v731
  %v870 = vadd.f32 %v865, %v732
  %v871 = vsel %vm171, %v866, -inf
  %872 = vmax.xlane.f32.xlu0 %v871
  %v873 = vpop.xlane.xlu0 %872
  %v874 = vsel %vm171, %v867, -inf
  %875 = vmax.xlane.f32.xlu0 %v874
  %v876 = vpop.xlane.xlu0 %875
  %v877 = vsel %vm171, %v868, -inf
  %878 = vmax.xlane.f32.xlu0 %v877
  %v879 = vpop.xlane.xlu0 %878
  %v880 = vsel %vm171, %v869, -inf
  %881 = vmax.xlane.f32.xlu0 %v880
  %v882 = vpop.xlane.xlu0 %881
  %vm883 = vcmask 271360
  %v884 = vsel %vm883, %v870, -inf
  %885 = vmax.xlane.f32.xlu0 %v884
  %v886 = vpop.xlane.xlu0 %885
  %v887 = vsub.f32 %v866, %v873
  %v888 = vsub.f32 %v867, %v876
  %v889 = vsub.f32 %v868, %v879
  %v890 = vsub.f32 %v869, %v882
  %v891 = vsub.f32 %v870, %v886
  %v892 = vmul.f32 %v887, 1.442695
  %v893 = vpow.pop %v892
  %v894 = vmul.f32 %v888, 1.442695
  %v895 = vpow.pop %v894
  %v896 = vmul.f32 %v889, 1.442695
  %v897 = vpow.pop %v896
  %v898 = vmul.f32 %v890, 1.442695
  %v899 = vpow.pop %v898
  %v900 = vmul.f32 %v891, 1.442695
  %v901 = vpow.pop %v900
  %v902 = vsel %vm171, %v893, 0.0
  %903 = vadd.xlane.f32.xlu0 %v902
  %v904 = vpop.xlane.xlu0 %903
  %v905 = vsel %vm171, %v895, 0.0
  %906 = vadd.xlane.f32.xlu0 %v905
  %v907 = vpop.xlane.xlu0 %906
  %v908 = vsel %vm171, %v897, 0.0
  %909 = vadd.xlane.f32.xlu0 %v908
  %v910 = vpop.xlane.xlu0 %909
  %v911 = vsel %vm171, %v899, 0.0
  %912 = vadd.xlane.f32.xlu0 %v911
  %v913 = vpop.xlane.xlu0 %912
  %v914 = vsel %vm883, %v901, 0.0
  %915 = vadd.xlane.f32.xlu0 %v914
  %v916 = vpop.xlane.xlu0 %915
  %v917 = vrcp.pop %v904
  %v918 = vmul.f32 %v893, %v917
  %v919 = vrcp.pop %v907
  %v920 = vmul.f32 %v895, %v919
  %v921 = vrcp.pop %v910
  %v922 = vmul.f32 %v897, %v921
  %v923 = vrcp.pop %v913
  %v924 = vmul.f32 %v899, %v923
  %v925 = vrcp.pop %v916
  %v926 = vmul.f32 %v901, %v925
  %vm927 = vcmp.ge.s32.totalorder %v734, 0
  %vm928 = vcmp.lt.s32.totalorder %v734, 16
  %vm929 = vmand %vm927, %vm928
  %v930 = vsel %vm929, 1, 0
  %vm931 = vcmp.eq.s32.totalorder %v930, 1
  %932 = vrot.lane.b32.xlu0 %v705, 64
  %v933 = vpop.permute.xlu0 %932
  %934 = vrot.lane.b32.xlu0 %v710, 64
  %v935 = vpop.permute.xlu0 %934
  %936 = vrot.lane.b32.xlu0 %v715, 64
  %v937 = vpop.permute.xlu0 %936
  %938 = vrot.lane.b32.xlu0 %v720, 64
  %v939 = vpop.permute.xlu0 %938
  %940 = vrot.lane.b32.xlu0 %v725, 64
  %v941 = vpop.permute.xlu0 %940
  %v947 = vsel %vm931, %v933, 0.0
  %v948 = vsel %vm931, %v935, 0.0
  %v949 = vsel %vm931, %v937, 0.0
  %v950 = vsel %vm931, %v939, 0.0
  %v951 = vsel %vm931, %v941, 0.0
  %952 = vrot.lane.b32.xlu0 %v705, 112
  %v953 = vpop.permute.xlu0 %952
  %954 = vrot.lane.b32.xlu0 %v710, 112
  %v955 = vpop.permute.xlu0 %954
  %956 = vrot.lane.b32.xlu0 %v715, 112
  %v957 = vpop.permute.xlu0 %956
  %958 = vrot.lane.b32.xlu0 %v720, 112
  %v959 = vpop.permute.xlu0 %958
  %960 = vrot.lane.b32.xlu0 %v725, 112
  %v961 = vpop.permute.xlu0 %960
  %962 = vrot.lane.b32.xlu0 %v705, 80
  %v963 = vpop.permute.xlu0 %962
  %964 = vrot.lane.b32.xlu0 %v710, 80
  %v965 = vpop.permute.xlu0 %964
  %966 = vrot.lane.b32.xlu0 %v715, 80
  %v967 = vpop.permute.xlu0 %966
  %968 = vrot.lane.b32.xlu0 %v720, 80
  %v969 = vpop.permute.xlu0 %968
  %970 = vrot.lane.b32.xlu0 %v725, 80
  %v971 = vpop.permute.xlu0 %970
  %v972 = vsel %vm750, %v953, 0
  %v974 = vsel %vm750, %v955, 0
  %v976 = vsel %vm750, %v957, 0
  %v978 = vsel %vm750, %v959, 0
  %v980 = vsel %vm750, %v961, 0
  %v982 = vsel %vm750, %v963, 0
  %v984 = vsel %vm750, %v965, 0
  %v986 = vsel %vm750, %v967, 0
  %v988 = vsel %vm750, %v969, 0
  %v990 = vsel %vm750, %v971, 0
  %992 = vmatprep.subr.mxu0 0.0
  %993 = vmatpush1.xpose.msra.mxu0 %v982
  %994 = vmatprep.subr.mxu0 0.0
  %995 = vmatpush1.xpose.msra.mxu0 %v984
  %996 = vmatprep.subr.mxu0 0.0
  %997 = vmatpush1.xpose.msra.mxu0 %v986
  %998 = vmatprep.subr.mxu0 0.0
  %999 = vmatpush1.xpose.msra.mxu0 %v988
  %1000 = vmatprep.subr.mxu0 0.0
  %1001 = vmatpush1.xpose.msra.mxu0 %v990
  %1002 = vmatprep.subr.mxu0 0.0
  %1003 = vmatpush1.xpose.msra.mxu0 0.0
  %1004 = vmatprep.subr.mxu0 0.0
  %1005 = vmatpush1.xpose.msra.mxu0 0.0
  %1006 = vmatprep.subr.mxu0 0.0
  %1007 = vmatpush1.xpose.msra.mxu0 0.0
  %1008 = vmatprep.subr.mxu0 0.0
  %1009 = vmatpush1.xpose.msra.mxu0 0.0
  %1010 = vmatprep.subr.mxu0 0.0
  %1011 = vmatpush1.xpose.msra.mxu0 0.0
  %1012 = vmatprep.subr.mxu0 0.0
  %1013 = vmatpush1.xpose.msra.mxu0 0.0
  %1014 = vmatprep.subr.mxu0 0.0
  %1015 = vmatpush1.xpose.msra.mxu0 0.0
  %1016 = vmatprep.subr.mxu0 0.0
  %1017 = vmatpush1.xpose.msra.mxu0 0.0
  %1018 = vmatprep.subr.mxu0 0.0
  %1019 = vmatpush1.xpose.msra.mxu0 0.0
  %1020 = vmatprep.subr.mxu0 0.0
  %1021 = vmatpush1.xpose.msra.mxu0 0.0
  %1022 = vmatprep.subr.mxu0 0.0
  %1023 = vmatpush1.xpose.msra.mxu0 0.0
  %1024 = vmatprep.subr.mxu0 0.0
  %1025 = vmatpush1.xpose.msra.mxu0 0.0
  %1026 = vmatprep.subr.mxu0 0.0
  %1027 = vmatpush1.xpose.msra.mxu0 0.0
  %1028 = vmatprep.subr.mxu0 0.0
  %1029 = vmatpush1.xpose.msra.mxu0 0.0
  %1030 = vmatprep.subr.mxu0 0.0
  %1031 = vmatpush1.xpose.msra.mxu0 0.0
  %1032 = vmatprep.subr.mxu0 0.0
  %1033 = vmatpush1.xpose.msra.mxu0 0.0
  %1034 = vmatprep.subr.mxu0 0.0
  %1035 = vmatpush1.xpose.msra.mxu0 0.0
  %1036 = vmatprep.subr.mxu0 0.0
  %1037 = vmatpush1.xpose.msra.mxu0 0.0
  %1038 = vmatprep.subr.mxu0 0.0
  %1039 = vmatpush1.xpose.msra.mxu0 0.0
  %1040 = vmatprep.subr.mxu0 0.0
  %1041 = vmatpush1.xpose.msra.mxu0 0.0
  %1042 = vmatprep.subr.mxu0 0.0
  %1043 = vmatpush1.xpose.msra.mxu0 0.0
  %1044 = vmatprep.subr.mxu0 0.0
  %1045 = vmatpush1.xpose.msra.mxu0 0.0
  %1046 = vmatprep.subr.mxu0 0.0
  %1047 = vmatpush1.xpose.msra.mxu0 0.0
  %1048 = vmatprep.subr.mxu0 0.0
  %1049 = vmatpush1.xpose.msra.mxu0 0.0
  %1050 = vmatprep.subr.mxu0 0.0
  %1051 = vmatpush1.xpose.msra.mxu0 0.0
  %1052 = vmatprep.subr.mxu0 0.0
  %1053 = vmatpush1.xpose.msra.mxu0 0.0
  %1054 = vmatprep.subr.mxu0 0.0
  %1055 = vmatpush1.xpose.msra.mxu0 0.0
  %1056 = vmatprep.mubr.f32.mxu0 0.0
  %1057 = vmatmul.mubr.f32.gmra.mrb[0].mxu0 %v972
  %v1058 = vpop.f32.mrb[0].mxu0
  %v1059 = vadd.f32 0.0, %v1058
  %v1060 = vpop.f32.mrb[0].mxu0
  %1061 = vmatprep.mubr.f32.mxu0 0.0
  %1062 = vmatmul.mubr.f32.gmra.mrb[0].mxu0 %v974
  %v1063 = vpop.f32.mrb[0].mxu0
  %v1064 = vadd.f32 0.0, %v1063
  %v1065 = vpop.f32.mrb[0].mxu0
  %1066 = vmatprep.mubr.f32.mxu0 0.0
  %1067 = vmatmul.mubr.f32.gmra.mrb[0].mxu0 %v976
  %v1068 = vpop.f32.mrb[0].mxu0
  %v1069 = vadd.f32 0.0, %v1068
  %v1070 = vpop.f32.mrb[0].mxu0
  %1071 = vmatprep.mubr.f32.mxu0 0.0
  %1072 = vmatmul.mubr.f32.gmra.mrb[0].mxu0 %v978
  %v1073 = vpop.f32.mrb[0].mxu0
  %v1074 = vadd.f32 0.0, %v1073
  %v1075 = vpop.f32.mrb[0].mxu0
  %1076 = vmatprep.mubr.f32.mxu0 0.0
  %1077 = vmatmul.mubr.f32.gmra.mrb[0].mxu0 %v980
  %v1078 = vpop.f32.mrb[0].mxu0
  %v1079 = vadd.f32 0.0, %v1078
  %v1080 = vpop.f32.mrb[0].mxu0
  %1081 = vdwg.mxu0
  %v1082 = vmul.f32 %v1059, 0.25
  %v1083 = vmul.f32 %v1064, 0.25
  %v1084 = vmul.f32 %v1069, 0.25
  %v1085 = vmul.f32 %v1074, 0.25
  %v1086 = vmul.f32 %v1079, 0.25
  %v1087 = vadd.f32 %v1082, %v728
  %v1088 = vadd.f32 %v1083, %v729
  %v1089 = vadd.f32 %v1084, %v730
  %v1090 = vadd.f32 %v1085, %v731
  %v1091 = vadd.f32 %v1086, %v732
  %v1092 = vsel %vm171, %v1087, -inf
  %1093 = vmax.xlane.f32.xlu0 %v1092
  %v1094 = vpop.xlane.xlu0 %1093
  %v1095 = vsel %vm171, %v1088, -inf
  %1096 = vmax.xlane.f32.xlu0 %v1095
  %v1097 = vpop.xlane.xlu0 %1096
  %v1098 = vsel %vm171, %v1089, -inf
  %1099 = vmax.xlane.f32.xlu0 %v1098
  %v1100 = vpop.xlane.xlu0 %1099
  %v1101 = vsel %vm171, %v1090, -inf
  %1102 = vmax.xlane.f32.xlu0 %v1101
  %v1103 = vpop.xlane.xlu0 %1102
  %v1104 = vsel %vm883, %v1091, -inf
  %1105 = vmax.xlane.f32.xlu0 %v1104
  %v1106 = vpop.xlane.xlu0 %1105
  %v1107 = vsub.f32 %v1087, %v1094
  %v1108 = vsub.f32 %v1088, %v1097
  %v1109 = vsub.f32 %v1089, %v1100
  %v1110 = vsub.f32 %v1090, %v1103
  %v1111 = vsub.f32 %v1091, %v1106
  %v1112 = vmul.f32 %v1107, 1.442695
  %v1113 = vpow.pop %v1112
  %v1114 = vmul.f32 %v1108, 1.442695
  %v1115 = vpow.pop %v1114
  %v1116 = vmul.f32 %v1109, 1.442695
  %v1117 = vpow.pop %v1116
  %v1118 = vmul.f32 %v1110, 1.442695
  %v1119 = vpow.pop %v1118
  %v1120 = vmul.f32 %v1111, 1.442695
  %v1121 = vpow.pop %v1120
  %v1122 = vsel %vm171, %v1113, 0.0
  %1123 = vadd.xlane.f32.xlu0 %v1122
  %v1124 = vpop.xlane.xlu0 %1123
  %v1125 = vsel %vm171, %v1115, 0.0
  %1126 = vadd.xlane.f32.xlu0 %v1125
  %v1127 = vpop.xlane.xlu0 %1126
  %v1128 = vsel %vm171, %v1117, 0.0
  %1129 = vadd.xlane.f32.xlu0 %v1128
  %v1130 = vpop.xlane.xlu0 %1129
  %v1131 = vsel %vm171, %v1119, 0.0
  %1132 = vadd.xlane.f32.xlu0 %v1131
  %v1133 = vpop.xlane.xlu0 %1132
  %v1134 = vsel %vm883, %v1121, 0.0
  %1135 = vadd.xlane.f32.xlu0 %v1134
  %v1136 = vpop.xlane.xlu0 %1135
  %v1137 = vrcp.pop %v1124
  %v1138 = vmul.f32 %v1113, %v1137
  %v1139 = vrcp.pop %v1127
  %v1140 = vmul.f32 %v1115, %v1139
  %v1141 = vrcp.pop %v1130
  %v1142 = vmul.f32 %v1117, %v1141
  %v1143 = vrcp.pop %v1133
  %v1144 = vmul.f32 %v1119, %v1143
  %v1145 = vrcp.pop %v1136
  %v1146 = vmul.f32 %v1121, %v1145
  %vm1147 = vcmp.ge.s32.totalorder %v734, 16
  %vm1148 = vcmp.lt.s32.totalorder %v734, 32
  %vm1149 = vmand %vm1147, %vm1148
  %v1150 = vsel %vm1149, 1, 0
  %vm1151 = vcmp.eq.s32.totalorder %v1150, 1
  %v1152 = vsel %vm1151, %v933, 0.0
  %v1153 = vsel %vm1151, %v935, 0.0
  %v1154 = vsel %vm1151, %v937, 0.0
  %v1155 = vsel %vm1151, %v939, 0.0
  %v1156 = vsel %vm1151, %v941, 0.0
  %v1158 = vsel %vm171, %v1138, 0
  %v1161 = vsel %vm171, %v1140, 0
  %v1164 = vsel %vm171, %v1142, 0
  %v1167 = vsel %vm171, %v1144, 0
  %v1170 = vsel %vm171, %v1146, 0
  %v1173 = vsel %vm175, %v1156, 0
  %1175 = vmatprep.subr.mxu0 0.0
  %1176 = vmatpush1.msra.mxu0 %v1152
  %1177 = vmatprep.subr.mxu0 0.0
  %1178 = vmatpush1.msra.mxu0 %v1153
  %1179 = vmatprep.subr.mxu0 0.0
  %1180 = vmatpush1.msra.mxu0 %v1154
  %1181 = vmatprep.subr.mxu0 0.0
  %1182 = vmatpush1.msra.mxu0 %v1155
  %1183 = vmatprep.subr.mxu0 0.0
  %1184 = vmatpush1.msra.mxu0 %v1173
  %1185 = vmatprep.subr.mxu0 0.0
  %1186 = vmatpush1.msra.mxu0 0.0
  %1187 = vmatprep.subr.mxu0 0.0
  %1188 = vmatpush1.msra.mxu0 0.0
  %1189 = vmatprep.subr.mxu0 0.0
  %1190 = vmatpush1.msra.mxu0 0.0
  %1191 = vmatprep.subr.mxu0 0.0
  %1192 = vmatpush1.msra.mxu0 0.0
  %1193 = vmatprep.subr.mxu0 0.0
  %1194 = vmatpush1.msra.mxu0 0.0
  %1195 = vmatprep.subr.mxu0 0.0
  %1196 = vmatpush1.msra.mxu0 0.0
  %1197 = vmatprep.subr.mxu0 0.0
  %1198 = vmatpush1.msra.mxu0 0.0
  %1199 = vmatprep.subr.mxu0 0.0
  %1200 = vmatpush1.msra.mxu0 0.0
  %1201 = vmatprep.subr.mxu0 0.0
  %1202 = vmatpush1.msra.mxu0 0.0
  %1203 = vmatprep.subr.mxu0 0.0
  %1204 = vmatpush1.msra.mxu0 0.0
  %1205 = vmatprep.subr.mxu0 0.0
  %1206 = vmatpush1.msra.mxu0 0.0
  %1207 = vmatprep.subr.mxu0 0.0
  %1208 = vmatpush1.msra.mxu0 0.0
  %1209 = vmatprep.subr.mxu0 0.0
  %1210 = vmatpush1.msra.mxu0 0.0
  %1211 = vmatprep.subr.mxu0 0.0
  %1212 = vmatpush1.msra.mxu0 0.0
  %1213 = vmatprep.subr.mxu0 0.0
  %1214 = vmatpush1.msra.mxu0 0.0
  %1215 = vmatprep.subr.mxu0 0.0
  %1216 = vmatpush1.msra.mxu0 0.0
  %1217 = vmatprep.subr.mxu0 0.0
  %1218 = vmatpush1.msra.mxu0 0.0
  %1219 = vmatprep.subr.mxu0 0.0
  %1220 = vmatpush1.msra.mxu0 0.0
  %1221 = vmatprep.subr.mxu0 0.0
  %1222 = vmatpush1.msra.mxu0 0.0
  %1223 = vmatprep.subr.mxu0 0.0
  %1224 = vmatpush1.msra.mxu0 0.0
  %1225 = vmatprep.subr.mxu0 0.0
  %1226 = vmatpush1.msra.mxu0 0.0
  %1227 = vmatprep.subr.mxu0 0.0
  %1228 = vmatpush1.msra.mxu0 0.0
  %1229 = vmatprep.subr.mxu0 0.0
  %1230 = vmatpush1.msra.mxu0 0.0
  %1231 = vmatprep.subr.mxu0 0.0
  %1232 = vmatpush1.msra.mxu0 0.0
  %1233 = vmatprep.subr.mxu0 0.0
  %1234 = vmatpush1.msra.mxu0 0.0
  %1235 = vmatprep.subr.mxu0 0.0
  %1236 = vmatpush1.msra.mxu0 0.0
  %1237 = vmatprep.subr.mxu0 0.0
  %1238 = vmatpush1.msra.mxu0 0.0
  %1239 = vmatprep.mubr.f32.mxu0 0.0
  %1240 = vmatmul.mubr.f32.gmra.mrb[0].mxu0 %v1158
  %v1241 = vpop.f32.mrb[0].mxu0
  %v1242 = vadd.f32 0.0, %v1241
  %v1243 = vpop.f32.mrb[0].mxu0
  %1244 = vmatprep.mubr.f32.mxu0 0.0
  %1245 = vmatmul.mubr.f32.gmra.mrb[0].mxu0 %v1161
  %v1246 = vpop.f32.mrb[0].mxu0
  %v1247 = vadd.f32 0.0, %v1246
  %v1248 = vpop.f32.mrb[0].mxu0
  %1249 = vmatprep.mubr.f32.mxu0 0.0
  %1250 = vmatmul.mubr.f32.gmra.mrb[0].mxu0 %v1164
  %v1251 = vpop.f32.mrb[0].mxu0
  %v1252 = vadd.f32 0.0, %v1251
  %v1253 = vpop.f32.mrb[0].mxu0
  %1254 = vmatprep.mubr.f32.mxu0 0.0
  %1255 = vmatmul.mubr.f32.gmra.mrb[0].mxu0 %v1167
  %v1256 = vpop.f32.mrb[0].mxu0
  %v1257 = vadd.f32 0.0, %v1256
  %v1258 = vpop.f32.mrb[0].mxu0
  %1259 = vmatprep.mubr.f32.mxu0 0.0
  %1260 = vmatmul.mubr.f32.gmra.mrb[0].mxu0 %v1170
  %v1261 = vpop.f32.mrb[0].mxu0
  %v1262 = vadd.f32 0.0, %v1261
  %v1263 = vpop.f32.mrb[0].mxu0
  %1264 = vdwg.mxu0
  %v1266 = vsel %vm171, %v918, 0
  %v1269 = vsel %vm171, %v920, 0
  %v1272 = vsel %vm171, %v922, 0
  %v1275 = vsel %vm171, %v924, 0
  %v1278 = vsel %vm171, %v926, 0
  %v1281 = vsel %vm175, %v951, 0
  %1283 = vmatprep.subr.mxu0 0.0
  %1284 = vmatpush1.msra.mxu0 %v947
  %1285 = vmatprep.subr.mxu0 0.0
  %1286 = vmatpush1.msra.mxu0 %v948
  %1287 = vmatprep.subr.mxu0 0.0
  %1288 = vmatpush1.msra.mxu0 %v949
  %1289 = vmatprep.subr.mxu0 0.0
  %1290 = vmatpush1.msra.mxu0 %v950
  %1291 = vmatprep.subr.mxu0 0.0
  %1292 = vmatpush1.msra.mxu0 %v1281
  %1293 = vmatprep.subr.mxu0 0.0
  %1294 = vmatpush1.msra.mxu0 0.0
  %1295 = vmatprep.subr.mxu0 0.0
  %1296 = vmatpush1.msra.mxu0 0.0
  %1297 = vmatprep.subr.mxu0 0.0
  %1298 = vmatpush1.msra.mxu0 0.0
  %1299 = vmatprep.subr.mxu0 0.0
  %1300 = vmatpush1.msra.mxu0 0.0
  %1301 = vmatprep.subr.mxu0 0.0
  %1302 = vmatpush1.msra.mxu0 0.0
  %1303 = vmatprep.subr.mxu0 0.0
  %1304 = vmatpush1.msra.mxu0 0.0
  %1305 = vmatprep.subr.mxu0 0.0
  %1306 = vmatpush1.msra.mxu0 0.0
  %1307 = vmatprep.subr.mxu0 0.0
  %1308 = vmatpush1.msra.mxu0 0.0
  %1309 = vmatprep.subr.mxu0 0.0
  %1310 = vmatpush1.msra.mxu0 0.0
  %1311 = vmatprep.subr.mxu0 0.0
  %1312 = vmatpush1.msra.mxu0 0.0
  %1313 = vmatprep.subr.mxu0 0.0
  %1314 = vmatpush1.msra.mxu0 0.0
  %1315 = vmatprep.subr.mxu0 0.0
  %1316 = vmatpush1.msra.mxu0 0.0
  %1317 = vmatprep.subr.mxu0 0.0
  %1318 = vmatpush1.msra.mxu0 0.0
  %1319 = vmatprep.subr.mxu0 0.0
  %1320 = vmatpush1.msra.mxu0 0.0
  %1321 = vmatprep.subr.mxu0 0.0
  %1322 = vmatpush1.msra.mxu0 0.0
  %1323 = vmatprep.subr.mxu0 0.0
  %1324 = vmatpush1.msra.mxu0 0.0
  %1325 = vmatprep.subr.mxu0 0.0
  %1326 = vmatpush1.msra.mxu0 0.0
  %1327 = vmatprep.subr.mxu0 0.0
  %1328 = vmatpush1.msra.mxu0 0.0
  %1329 = vmatprep.subr.mxu0 0.0
  %1330 = vmatpush1.msra.mxu0 0.0
  %1331 = vmatprep.subr.mxu0 0.0
  %1332 = vmatpush1.msra.mxu0 0.0
  %1333 = vmatprep.subr.mxu0 0.0
  %1334 = vmatpush1.msra.mxu0 0.0
  %1335 = vmatprep.subr.mxu0 0.0
  %1336 = vmatpush1.msra.mxu0 0.0
  %1337 = vmatprep.subr.mxu0 0.0
  %1338 = vmatpush1.msra.mxu0 0.0
  %1339 = vmatprep.subr.mxu0 0.0
  %1340 = vmatpush1.msra.mxu0 0.0
  %1341 = vmatprep.subr.mxu0 0.0
  %1342 = vmatpush1.msra.mxu0 0.0
  %1343 = vmatprep.subr.mxu0 0.0
  %1344 = vmatpush1.msra.mxu0 0.0
  %1345 = vmatprep.subr.mxu0 0.0
  %1346 = vmatpush1.msra.mxu0 0.0
  %1347 = vmatprep.mubr.f32.mxu0 0.0
  %1348 = vmatmul.mubr.f32.gmra.mrb[0].mxu0 %v1266
  %v1349 = vpop.f32.mrb[0].mxu0
  %v1350 = vadd.f32 %v1242, %v1349
  %v1351 = vpop.f32.mrb[0].mxu0
  %1352 = vmatprep.mubr.f32.mxu0 0.0
  %1353 = vmatmul.mubr.f32.gmra.mrb[0].mxu0 %v1269
  %v1354 = vpop.f32.mrb[0].mxu0
  %v1355 = vadd.f32 %v1247, %v1354
  %v1356 = vpop.f32.mrb[0].mxu0
  %1357 = vmatprep.mubr.f32.mxu0 0.0
  %1358 = vmatmul.mubr.f32.gmra.mrb[0].mxu0 %v1272
  %v1359 = vpop.f32.mrb[0].mxu0
  %v1360 = vadd.f32 %v1252, %v1359
  %v1361 = vpop.f32.mrb[0].mxu0
  %1362 = vmatprep.mubr.f32.mxu0 0.0
  %1363 = vmatmul.mubr.f32.gmra.mrb[0].mxu0 %v1275
  %v1364 = vpop.f32.mrb[0].mxu0
  %v1365 = vadd.f32 %v1257, %v1364
  %v1366 = vpop.f32.mrb[0].mxu0
  %1367 = vmatprep.mubr.f32.mxu0 0.0
  %1368 = vmatmul.mubr.f32.gmra.mrb[0].mxu0 %v1278
  %v1369 = vpop.f32.mrb[0].mxu0
  %v1370 = vadd.f32 %v1262, %v1369
  %v1371 = vpop.f32.mrb[0].mxu0
  %1372 = vdwg.mxu0
  %v1373 = vadd.f32 %v142, %v1350
  %v1374 = vadd.f32 %v147, %v1355
  %v1375 = vadd.f32 %v152, %v1360
  %v1376 = vadd.f32 %v157, %v1365
  %v1377 = vadd.f32 %v162, %v1370
  %1378 = vst.msk [vmem:[%s8] sm:$0xff] %vm363, %v1373
  %1379 = vst.msk [vmem:[%s8 + $0x8] sm:$0xff] %vm363, %v1374
  %1380 = vst.msk [vmem:[%s8 + $0x10] sm:$0xff] %vm363, %v1375
  %1381 = vst.msk [vmem:[%s8 + $0x18] sm:$0xff] %vm363, %v1376
  %1382 = vst.msk [vmem:[%s8 + $0x20] sm:$0x3] %vm376, %v1377
  // Predicated region
  $region34: #{tpu_custom_call.1} parent=0 // pred_check
    _
  $region35: #{tpu_custom_call.1} parent=0 // pred_check_branch
    %1384 = sbr.rel (0) target = $region37
  $region36: #{tpu_custom_call.1} parent=0 // pred_region
    _
  $region37: #{tpu_custom_call.1} parent=0 // pred_fallthru
    _
  // Predicated region
  $region38: #{tpu_custom_call.1} parent=0 // pred_check
    _
  $region39: #{tpu_custom_call.1} parent=0 // pred_check_branch
    %1386 = sbr.rel (0) target = $region41
  $region40: #{tpu_custom_call.1} parent=0 // pred_region
    _
  $region41: #{tpu_custom_call.1} parent=0 // pred_fallthru
    _

</llo_original>
